<compile_context>
chip_gen: v5e
topology: v5e:2x2
jax: 0.10.0
libtpu: 0.0.40
codegen_flags: <defaults>
</compile_context>

<pallas_src>
import functools
import math

import numpy as np
import jax
import jax.numpy as jnp
from jax.experimental import pallas as pl
from jax.experimental.pallas import tpu as pltpu

_LANCZOS_G = 7.0
_LANCZOS_COEF = (
    0.99999999999980993,
    676.5203681218851,
    -1259.1392167224028,
    771.32342877765313,
    -176.61502916214059,
    12.507343278686905,
    -0.13857109526572012,
    9.9843695780195716e-6,
    1.5056327351493116e-7,
)
_HALF_LOG_2PI = 0.5 * math.log(2.0 * math.pi)


def _lanczos_rational_coefs():
    """Fold the Lanczos partial-fraction sum into num(x)/den(x).

    S(x) = c0 + sum_i c_i/(x+i)  ==  P(x)/Q(x),  Q(x) = prod_i (x+i).
    Precomputed once in float64; per element this costs one divide instead of
    eight (divides hit the single EUP slot, which is the binding unit here).
    """
    c = _LANCZOS_COEF
    den = np.array([1.0])
    for i in range(1, len(c)):
        den = np.polymul(den, [1.0, float(i)])
    num = c[0] * den
    for j in range(1, len(c)):
        pj = np.array([1.0])
        for i in range(1, len(c)):
            if i != j:
                pj = np.polymul(pj, [1.0, float(i)])
        num = np.polyadd(num, c[j] * pj)
    return tuple(float(v) for v in num), tuple(float(v) for v in den)


_LANCZOS_NUM, _LANCZOS_DEN = _lanczos_rational_coefs()


def _horner(x, coefs):
    acc = x * coefs[0] + coefs[1]
    for c in coefs[2:]:
        acc = acc * x + c
    return acc


def _lgamma_pieces(z):
    """Return (main, series) with lgamma(z) = main + log(series), z > 0.

    Returning the series un-logged lets the caller merge the three series logs
    of the loss into a single EUP log.  Only VPU mul/add + 1 divide + 1 log.
    """
    zm1 = z - 1.0
    t = zm1 + (_LANCZOS_G + 0.5)
    main = _HALF_LOG_2PI + (zm1 + 0.5) * jnp.log(t) - t
    # Clamp the polynomial argument so the degree-8 num/den stay in f32 range
    # (x**8 overflows past ~6e4).  Beyond 16384 the dropped series correction
    # is < 2e-3 in lgamma, far below f32 precision of lgamma at that scale.
    xs = jnp.minimum(zm1, 16384.0)
    series = _horner(xs, _LANCZOS_NUM) / _horner(xs, _LANCZOS_DEN)
    return main, series


def _nb_loss_kernel(pred_ref, theta_ref, target_ref, out_ref, acc_ref, l1_ref, *,
                    scale_factor, eps, l1_lambda, inv_n_total, n_rows):
    j = pl.program_id(1)

    @pl.when(j == 0)
    def _init():
        acc_ref[...] = jnp.zeros_like(acc_ref)
        if l1_lambda != 0.0:
            l1_ref[...] = jnp.zeros_like(l1_ref)

    # Inputs stay in their native dtype for the HBM->VMEM DMA; cast here.
    pred = pred_ref[...].astype(jnp.float32)
    theta = jnp.minimum(theta_ref[...].astype(jnp.float32), 1e6)  # clamp(max=1e6)
    y_true = target_ref[...].astype(jnp.float32)

    y_hat = pred if scale_factor == 1.0 else pred * scale_factor
    th_eps = theta + eps

    main_a, s_a = _lgamma_pieces(y_true + th_eps)   # lgamma(y + theta + eps)
    main_b, s_b = _lgamma_pieces(y_true + 1.0)      # lgamma(y + 1)
    main_c, s_c = _lgamma_pieces(th_eps)            # lgamma(theta + eps)
    # t1 = -lgamma(a) + lgamma(b) + lgamma(c); merge the three series logs.
    t1 = (main_b + main_c - main_a) + jnp.log(s_b * s_c / s_a)

    # t2_alter; log1p matches the torch reference, and the two logs of t2's
    # second term are merged into one log of a ratio.
    t2 = ((theta + y_true) * jnp.log1p(y_hat / th_eps)
          + y_true * jnp.log(th_eps / (y_hat + eps)))
    retval = t1 + t2

    # Reduce the tile to a (B, 1) partial (XLU; free while the EUP is busy).
    acc_ref[...] += jnp.sum(retval, axis=1, keepdims=True)

    if l1_lambda != 0.0:
        # params = pred[:-1]: exclude the last batch row.  The whole batch is
        # resident in every block, so the local row index is the global one.
        row = jax.lax.broadcasted_iota(jnp.int32, pred.shape, 0)
        l1_masked = jnp.where(row < (n_rows - 1), jnp.abs(pred), 0.0)
        l1_ref[...] += jnp.sum(l1_masked, axis=1, keepdims=True)

    @pl.when(j == pl.num_programs(1) - 1)
    def _finalize():
        total = jnp.sum(acc_ref[...], axis=0, keepdims=True) * inv_n_total  # (1,1)
        if l1_lambda != 0.0:
            total = total + l1_lambda * jnp.sum(l1_ref[...], axis=0, keepdims=True)
        out_ref[...] = jnp.reshape(total, out_ref.shape)


def negative_binomial_loss(pred, theta, target, *, scale_factor=1.0, eps=1e-10,
                           l1_lambda=0.0, tile_g=512, num_parallel=2):
    """Pallas TPU implementation of NegativeBinomialLoss.forward (mean=True)."""
    # TODO(synk): mean=False variant (returns the elementwise tensor) not implemented.
    # TODO(synk): batch dim B is never tiled (L1 mask relies on the full batch
    # being in every block); for very large B on v7x (64 MiB VMEM), tile B and
    # rewrite the mask with the global row index.
    assert pred.shape == theta.shape == target.shape
    b, g = pred.shape
    assert g % 128 == 0, "feature dim must be a multiple of 128 lanes"

    # Leading "parallel" axis: independent feature halves so both v7x
    # TensorCores are used; no-op on single-core v5e/v6e.
    if num_parallel < 1 or g % (num_parallel * 128) != 0:
        num_parallel = 1
    gp = g // num_parallel

    # Largest lane-aligned tile <= tile_g dividing the per-slice extent
    # (big tiles amortize the ~0.35 us per-grid-step pipeline overhead).
    t = max(128, min(int(tile_g), gp))
    t = (t // 128) * 128
    while gp % t != 0:
        t -= 128
    tile_g = t
    blocks_per_slice = gp // tile_g

    kernel = functools.partial(
        _nb_loss_kernel,
        scale_factor=float(scale_factor),
        eps=float(eps),
        l1_lambda=float(l1_lambda),
        inv_n_total=1.0 / float(b * g),
        n_rows=b,
    )

    in_spec = pl.BlockSpec((b, tile_g),
                           lambda p, j: (0, p * blocks_per_slice + j))
    out = pl.pallas_call(
        kernel,
        out_shape=jax.ShapeDtypeStruct((num_parallel, 1, 1), jnp.float32),
        grid_spec=pltpu.PrefetchScalarGridSpec(
            num_scalar_prefetch=0,
            grid=(num_parallel, blocks_per_slice),
            in_specs=[in_spec, in_spec, in_spec],
            out_specs=pl.BlockSpec((1, 1, 1), lambda p, j: (p, 0, 0)),
            scratch_shapes=[pltpu.VMEM((b, 1), jnp.float32),   # NLL partials
                            pltpu.VMEM((b, 1), jnp.float32)],  # L1 partials
        ),
        compiler_params=pltpu.CompilerParams(
            dimension_semantics=("parallel", "arbitrary")),
    )(pred, theta, target)
    return jnp.sum(out[:, 0, 0])


def _reference_loss(pred, theta, target, *, scale_factor=1.0, eps=1e-10,
                    l1_lambda=0.0):
    from jax.scipy.special import gammaln
    y_hat = pred * scale_factor
    th = jnp.minimum(theta, 1e6)
    t1 = -gammaln(target + th + eps) + gammaln(target + 1.0) + gammaln(th + eps)
    t2_alter = ((th + target) * jnp.log1p(y_hat / (th + eps))
                + target * (jnp.log(th + eps) - jnp.log(y_hat + eps)))
    l = jnp.mean(t1 + t2_alter)
    return l + l1_lambda * jnp.abs(pred[:-1]).sum()


if __name__ == "__main__":
    key = jax.random.PRNGKey(0)
    k1, k2, k3 = jax.random.split(key, 3)
    B, G = 8, 2048  # batch=8, genes=2048 -> grid (2 parallel slices, 2 tiles)

    # NB loss expects nonnegative rates/counts and positive dispersion.
    pred = jax.random.uniform(k1, (B, G), jnp.float32, minval=0.1, maxval=5.0)
    theta = jax.random.uniform(k2, (B, G), jnp.float32, minval=0.5, maxval=10.0)
    target = jnp.floor(
        jax.random.uniform(k3, (B, G), jnp.float32, minval=0.0, maxval=10.0))

    scale_factor, eps, l1_lambda = 1.0, 1e-10, 0.01

    loss = negative_binomial_loss(pred, theta, target,
                                  scale_factor=scale_factor, eps=eps,
                                  l1_lambda=l1_lambda)
    loss = jax.block_until_ready(loss)

    ref = _reference_loss(pred, theta, target, scale_factor=scale_factor,
                          eps=eps, l1_lambda=l1_lambda)
    assert bool(jnp.isfinite(loss)), float(loss)
    assert abs(float(loss) - float(ref)) <= 2e-3 * (1.0 + abs(float(ref))), (
        float(loss), float(ref))
    print("KERNEL_OK")
</pallas_src>

<mosaic_0001>
module attributes {stable_mosaic.version = 11 : i64} {
  func.func @_nb_loss_kernel(%arg0: i32, %arg1: i32, %arg2: memref<8x512xf32, #tpu.memory_space<vmem>>, %arg3: memref<8x512xf32, #tpu.memory_space<vmem>>, %arg4: memref<8x512xf32, #tpu.memory_space<vmem>>, %arg5: memref<1x1x1xf32, #tpu.memory_space<vmem>>, %arg6: memref<8x1xf32, #tpu.memory_space<vmem>>, %arg7: memref<8x1xf32, #tpu.memory_space<vmem>>) attributes {dimension_semantics = [#tpu.dimension_semantics<parallel>, #tpu.dimension_semantics<arbitrary>], iteration_bounds = array<i64: 2, 2>, scalar_prefetch = 0 : i64, scratch_operands = 2 : i64, tpu.core_type = #tpu.core_type<tc>, window_params = [{transform_indices = @transform_0, window_bounds = array<i64: 8, 512>}, {transform_indices = @transform_1, window_bounds = array<i64: 8, 512>}, {transform_indices = @transform_2, window_bounds = array<i64: 8, 512>}, {transform_indices = @transform_3, window_bounds = array<i64: 1, 1, 1>}]} {
    %c0_i32 = arith.constant 0 : i32
    %0 = arith.cmpi eq, %arg1, %c0_i32 : i32
    %1 = arith.extui %0 : i1 to i32
    %c0_i32_0 = arith.constant 0 : i32
    %2 = arith.cmpi ne, %1, %c0_i32_0 : i32
    scf.if %2 {
      %cst_90 = arith.constant 0.000000e+00 : f32
      %241 = vector.broadcast %cst_90 : f32 to vector<8x1xf32>
      %c0_91 = arith.constant 0 : index
      %c0_92 = arith.constant 0 : index
      %242 = vector.load %arg6[%c0_91, %c0_92] : memref<8x1xf32, #tpu.memory_space<vmem>>, vector<8x1xf32>
      tpu.vector_store %arg6[%c0_91, %c0_92], %241 {strides = array<i32>} : memref<8x1xf32, #tpu.memory_space<vmem>>, vector<8x1xf32>,
      %cst_93 = arith.constant 0.000000e+00 : f32
      %243 = vector.broadcast %cst_93 : f32 to vector<8x1xf32>
      %c0_94 = arith.constant 0 : index
      %c0_95 = arith.constant 0 : index
      %244 = vector.load %arg7[%c0_94, %c0_95] : memref<8x1xf32, #tpu.memory_space<vmem>>, vector<8x1xf32>
      tpu.vector_store %arg7[%c0_94, %c0_95], %243 {strides = array<i32>} : memref<8x1xf32, #tpu.memory_space<vmem>>, vector<8x1xf32>,
    } else {
    }
    %c0 = arith.constant 0 : index
    %c0_1 = arith.constant 0 : index
    %3 = vector.load %arg2[%c0, %c0_1] : memref<8x512xf32, #tpu.memory_space<vmem>>, vector<8x512xf32>
    %c0_2 = arith.constant 0 : index
    %c0_3 = arith.constant 0 : index
    %4 = vector.load %arg3[%c0_2, %c0_3] : memref<8x512xf32, #tpu.memory_space<vmem>>, vector<8x512xf32>
    %cst = arith.constant 1.000000e+06 : f32
    %5 = vector.broadcast %cst : f32 to vector<8x512xf32>
    %6 = arith.minimumf %4, %5 : vector<8x512xf32>
    %c0_4 = arith.constant 0 : index
    %c0_5 = arith.constant 0 : index
    %7 = vector.load %arg4[%c0_4, %c0_5] : memref<8x512xf32, #tpu.memory_space<vmem>>, vector<8x512xf32>
    %cst_6 = arith.constant 1.000000e-10 : f32
    %8 = vector.broadcast %cst_6 : f32 to vector<8x512xf32>
    %9 = arith.addf %6, %8 : vector<8x512xf32>
    %10 = arith.addf %7, %9 : vector<8x512xf32>
    %cst_7 = arith.constant 1.000000e+00 : f32
    %11 = vector.broadcast %cst_7 : f32 to vector<8x512xf32>
    %12 = arith.subf %10, %11 : vector<8x512xf32>
    %cst_8 = arith.constant 7.500000e+00 : f32
    %13 = vector.broadcast %cst_8 : f32 to vector<8x512xf32>
    %14 = arith.addf %12, %13 : vector<8x512xf32>
    %cst_9 = arith.constant 5.000000e-01 : f32
    %15 = vector.broadcast %cst_9 : f32 to vector<8x512xf32>
    %16 = arith.addf %12, %15 : vector<8x512xf32>
    %17 = math.log %14 : vector<8x512xf32>
    %18 = arith.mulf %16, %17 : vector<8x512xf32>
    %cst_10 = arith.constant 0.918938517 : f32
    %19 = vector.broadcast %cst_10 : f32 to vector<8x512xf32>
    %20 = arith.addf %19, %18 : vector<8x512xf32>
    %21 = arith.subf %20, %14 : vector<8x512xf32>
    %cst_11 = arith.constant 1.638400e+04 : f32
    %22 = vector.broadcast %cst_11 : f32 to vector<8x512xf32>
    %23 = arith.minimumf %12, %22 : vector<8x512xf32>
    %cst_12 = arith.constant 1.000000e+00 : f32
    %24 = vector.broadcast %cst_12 : f32 to vector<8x512xf32>
    %25 = arith.mulf %23, %24 : vector<8x512xf32>
    %cst_13 = arith.constant 60.4583321 : f32
    %26 = vector.broadcast %cst_13 : f32 to vector<8x512xf32>
    %27 = arith.addf %25, %26 : vector<8x512xf32>
    %28 = arith.mulf %27, %23 : vector<8x512xf32>
    %cst_14 = arith.constant 1599.04248 : f32
    %29 = vector.broadcast %cst_14 : f32 to vector<8x512xf32>
    %30 = arith.addf %28, %29 : vector<8x512xf32>
    %31 = arith.mulf %30, %23 : vector<8x512xf32>
    %cst_15 = arith.constant 24165.5098 : f32
    %32 = vector.broadcast %cst_15 : f32 to vector<8x512xf32>
    %33 = arith.addf %31, %32 : vector<8x512xf32>
    %34 = arith.mulf %33, %23 : vector<8x512xf32>
    %cst_16 = arith.constant 228235.219 : f32
    %35 = vector.broadcast %cst_16 : f32 to vector<8x512xf32>
    %36 = arith.addf %34, %35 : vector<8x512xf32>
    %37 = arith.mulf %36, %23 : vector<8x512xf32>
    %cst_17 = arith.constant 1379496.25 : f32
    %38 = vector.broadcast %cst_17 : f32 to vector<8x512xf32>
    %39 = arith.addf %37, %38 : vector<8x512xf32>
    %40 = arith.mulf %39, %23 : vector<8x512xf32>
    %cst_18 = arith.constant 0x4A9F05EA : f32
    %41 = vector.broadcast %cst_18 : f32 to vector<8x512xf32>
    %42 = arith.addf %40, %41 : vector<8x512xf32>
    %43 = arith.mulf %42, %23 : vector<8x512xf32>
    %cst_19 = arith.constant 0x4B2B9D51 : f32
    %44 = vector.broadcast %cst_19 : f32 to vector<8x512xf32>
    %45 = arith.addf %43, %44 : vector<8x512xf32>
    %46 = arith.mulf %45, %23 : vector<8x512xf32>
    %cst_20 = arith.constant 0x4B220ADA : f32
    %47 = vector.broadcast %cst_20 : f32 to vector<8x512xf32>
    %48 = arith.addf %46, %47 : vector<8x512xf32>
    %cst_21 = arith.constant 1.000000e+00 : f32
    %49 = vector.broadcast %cst_21 : f32 to vector<8x512xf32>
    %50 = arith.mulf %23, %49 : vector<8x512xf32>
    %cst_22 = arith.constant 3.600000e+01 : f32
    %51 = vector.broadcast %cst_22 : f32 to vector<8x512xf32>
    %52 = arith.addf %50, %51 : vector<8x512xf32>
    %53 = arith.mulf %52, %23 : vector<8x512xf32>
    %cst_23 = arith.constant 5.460000e+02 : f32
    %54 = vector.broadcast %cst_23 : f32 to vector<8x512xf32>
    %55 = arith.addf %53, %54 : vector<8x512xf32>
    %56 = arith.mulf %55, %23 : vector<8x512xf32>
    %cst_24 = arith.constant 4.536000e+03 : f32
    %57 = vector.broadcast %cst_24 : f32 to vector<8x512xf32>
    %58 = arith.addf %56, %57 : vector<8x512xf32>
    %59 = arith.mulf %58, %23 : vector<8x512xf32>
    %cst_25 = arith.constant 2.244900e+04 : f32
    %60 = vector.broadcast %cst_25 : f32 to vector<8x512xf32>
    %61 = arith.addf %59, %60 : vector<8x512xf32>
    %62 = arith.mulf %61, %23 : vector<8x512xf32>
    %cst_26 = arith.constant 6.728400e+04 : f32
    %63 = vector.broadcast %cst_26 : f32 to vector<8x512xf32>
    %64 = arith.addf %62, %63 : vector<8x512xf32>
    %65 = arith.mulf %64, %23 : vector<8x512xf32>
    %cst_27 = arith.constant 1.181240e+05 : f32
    %66 = vector.broadcast %cst_27 : f32 to vector<8x512xf32>
    %67 = arith.addf %65, %66 : vector<8x512xf32>
    %68 = arith.mulf %67, %23 : vector<8x512xf32>
    %cst_28 = arith.constant 1.095840e+05 : f32
    %69 = vector.broadcast %cst_28 : f32 to vector<8x512xf32>
    %70 = arith.addf %68, %69 : vector<8x512xf32>
    %71 = arith.mulf %70, %23 : vector<8x512xf32>
    %cst_29 = arith.constant 4.032000e+04 : f32
    %72 = vector.broadcast %cst_29 : f32 to vector<8x512xf32>
    %73 = arith.addf %71, %72 : vector<8x512xf32>
    %74 = arith.divf %48, %73 : vector<8x512xf32>
    %cst_30 = arith.constant 1.000000e+00 : f32
    %75 = vector.broadcast %cst_30 : f32 to vector<8x512xf32>
    %76 = arith.addf %7, %75 : vector<8x512xf32>
    %cst_31 = arith.constant 1.000000e+00 : f32
    %77 = vector.broadcast %cst_31 : f32 to vector<8x512xf32>
    %78 = arith.subf %76, %77 : vector<8x512xf32>
    %cst_32 = arith.constant 7.500000e+00 : f32
    %79 = vector.broadcast %cst_32 : f32 to vector<8x512xf32>
    %80 = arith.addf %78, %79 : vector<8x512xf32>
    %cst_33 = arith.constant 5.000000e-01 : f32
    %81 = vector.broadcast %cst_33 : f32 to vector<8x512xf32>
    %82 = arith.addf %78, %81 : vector<8x512xf32>
    %83 = math.log %80 : vector<8x512xf32>
    %84 = arith.mulf %82, %83 : vector<8x512xf32>
    %cst_34 = arith.constant 0.918938517 : f32
    %85 = vector.broadcast %cst_34 : f32 to vector<8x512xf32>
    %86 = arith.addf %85, %84 : vector<8x512xf32>
    %87 = arith.subf %86, %80 : vector<8x512xf32>
    %cst_35 = arith.constant 1.638400e+04 : f32
    %88 = vector.broadcast %cst_35 : f32 to vector<8x512xf32>
    %89 = arith.minimumf %78, %88 : vector<8x512xf32>
    %cst_36 = arith.constant 1.000000e+00 : f32
    %90 = vector.broadcast %cst_36 : f32 to vector<8x512xf32>
    %91 = arith.mulf %89, %90 : vector<8x512xf32>
    %cst_37 = arith.constant 60.4583321 : f32
    %92 = vector.broadcast %cst_37 : f32 to vector<8x512xf32>
    %93 = arith.addf %91, %92 : vector<8x512xf32>
    %94 = arith.mulf %93, %89 : vector<8x512xf32>
    %cst_38 = arith.constant 1599.04248 : f32
    %95 = vector.broadcast %cst_38 : f32 to vector<8x512xf32>
    %96 = arith.addf %94, %95 : vector<8x512xf32>
    %97 = arith.mulf %96, %89 : vector<8x512xf32>
    %cst_39 = arith.constant 24165.5098 : f32
    %98 = vector.broadcast %cst_39 : f32 to vector<8x512xf32>
    %99 = arith.addf %97, %98 : vector<8x512xf32>
    %100 = arith.mulf %99, %89 : vector<8x512xf32>
    %cst_40 = arith.constant 228235.219 : f32
    %101 = vector.broadcast %cst_40 : f32 to vector<8x512xf32>
    %102 = arith.addf %100, %101 : vector<8x512xf32>
    %103 = arith.mulf %102, %89 : vector<8x512xf32>
    %cst_41 = arith.constant 1379496.25 : f32
    %104 = vector.broadcast %cst_41 : f32 to vector<8x512xf32>
    %105 = arith.addf %103, %104 : vector<8x512xf32>
    %106 = arith.mulf %105, %89 : vector<8x512xf32>
    %cst_42 = arith.constant 0x4A9F05EA : f32
    %107 = vector.broadcast %cst_42 : f32 to vector<8x512xf32>
    %108 = arith.addf %106, %107 : vector<8x512xf32>
    %109 = arith.mulf %108, %89 : vector<8x512xf32>
    %cst_43 = arith.constant 0x4B2B9D51 : f32
    %110 = vector.broadcast %cst_43 : f32 to vector<8x512xf32>
    %111 = arith.addf %109, %110 : vector<8x512xf32>
    %112 = arith.mulf %111, %89 : vector<8x512xf32>
    %cst_44 = arith.constant 0x4B220ADA : f32
    %113 = vector.broadcast %cst_44 : f32 to vector<8x512xf32>
    %114 = arith.addf %112, %113 : vector<8x512xf32>
    %cst_45 = arith.constant 1.000000e+00 : f32
    %115 = vector.broadcast %cst_45 : f32 to vector<8x512xf32>
    %116 = arith.mulf %89, %115 : vector<8x512xf32>
    %cst_46 = arith.constant 3.600000e+01 : f32
    %117 = vector.broadcast %cst_46 : f32 to vector<8x512xf32>
    %118 = arith.addf %116, %117 : vector<8x512xf32>
    %119 = arith.mulf %118, %89 : vector<8x512xf32>
    %cst_47 = arith.constant 5.460000e+02 : f32
    %120 = vector.broadcast %cst_47 : f32 to vector<8x512xf32>
    %121 = arith.addf %119, %120 : vector<8x512xf32>
    %122 = arith.mulf %121, %89 : vector<8x512xf32>
    %cst_48 = arith.constant 4.536000e+03 : f32
    %123 = vector.broadcast %cst_48 : f32 to vector<8x512xf32>
    %124 = arith.addf %122, %123 : vector<8x512xf32>
    %125 = arith.mulf %124, %89 : vector<8x512xf32>
    %cst_49 = arith.constant 2.244900e+04 : f32
    %126 = vector.broadcast %cst_49 : f32 to vector<8x512xf32>
    %127 = arith.addf %125, %126 : vector<8x512xf32>
    %128 = arith.mulf %127, %89 : vector<8x512xf32>
    %cst_50 = arith.constant 6.728400e+04 : f32
    %129 = vector.broadcast %cst_50 : f32 to vector<8x512xf32>
    %130 = arith.addf %128, %129 : vector<8x512xf32>
    %131 = arith.mulf %130, %89 : vector<8x512xf32>
    %cst_51 = arith.constant 1.181240e+05 : f32
    %132 = vector.broadcast %cst_51 : f32 to vector<8x512xf32>
    %133 = arith.addf %131, %132 : vector<8x512xf32>
    %134 = arith.mulf %133, %89 : vector<8x512xf32>
    %cst_52 = arith.constant 1.095840e+05 : f32
    %135 = vector.broadcast %cst_52 : f32 to vector<8x512xf32>
    %136 = arith.addf %134, %135 : vector<8x512xf32>
    %137 = arith.mulf %136, %89 : vector<8x512xf32>
    %cst_53 = arith.constant 4.032000e+04 : f32
    %138 = vector.broadcast %cst_53 : f32 to vector<8x512xf32>
    %139 = arith.addf %137, %138 : vector<8x512xf32>
    %140 = arith.divf %114, %139 : vector<8x512xf32>
    %cst_54 = arith.constant 1.000000e+00 : f32
    %141 = vector.broadcast %cst_54 : f32 to vector<8x512xf32>
    %142 = arith.subf %9, %141 : vector<8x512xf32>
    %cst_55 = arith.constant 7.500000e+00 : f32
    %143 = vector.broadcast %cst_55 : f32 to vector<8x512xf32>
    %144 = arith.addf %142, %143 : vector<8x512xf32>
    %cst_56 = arith.constant 5.000000e-01 : f32
    %145 = vector.broadcast %cst_56 : f32 to vector<8x512xf32>
    %146 = arith.addf %142, %145 : vector<8x512xf32>
    %147 = math.log %144 : vector<8x512xf32>
    %148 = arith.mulf %146, %147 : vector<8x512xf32>
    %cst_57 = arith.constant 0.918938517 : f32
    %149 = vector.broadcast %cst_57 : f32 to vector<8x512xf32>
    %150 = arith.addf %149, %148 : vector<8x512xf32>
    %151 = arith.subf %150, %144 : vector<8x512xf32>
    %cst_58 = arith.constant 1.638400e+04 : f32
    %152 = vector.broadcast %cst_58 : f32 to vector<8x512xf32>
    %153 = arith.minimumf %142, %152 : vector<8x512xf32>
    %cst_59 = arith.constant 1.000000e+00 : f32
    %154 = vector.broadcast %cst_59 : f32 to vector<8x512xf32>
    %155 = arith.mulf %153, %154 : vector<8x512xf32>
    %cst_60 = arith.constant 60.4583321 : f32
    %156 = vector.broadcast %cst_60 : f32 to vector<8x512xf32>
    %157 = arith.addf %155, %156 : vector<8x512xf32>
    %158 = arith.mulf %157, %153 : vector<8x512xf32>
    %cst_61 = arith.constant 1599.04248 : f32
    %159 = vector.broadcast %cst_61 : f32 to vector<8x512xf32>
    %160 = arith.addf %158, %159 : vector<8x512xf32>
    %161 = arith.mulf %160, %153 : vector<8x512xf32>
    %cst_62 = arith.constant 24165.5098 : f32
    %162 = vector.broadcast %cst_62 : f32 to vector<8x512xf32>
    %163 = arith.addf %161, %162 : vector<8x512xf32>
    %164 = arith.mulf %163, %153 : vector<8x512xf32>
    %cst_63 = arith.constant 228235.219 : f32
    %165 = vector.broadcast %cst_63 : f32 to vector<8x512xf32>
    %166 = arith.addf %164, %165 : vector<8x512xf32>
    %167 = arith.mulf %166, %153 : vector<8x512xf32>
    %cst_64 = arith.constant 1379496.25 : f32
    %168 = vector.broadcast %cst_64 : f32 to vector<8x512xf32>
    %169 = arith.addf %167, %168 : vector<8x512xf32>
    %170 = arith.mulf %169, %153 : vector<8x512xf32>
    %cst_65 = arith.constant 0x4A9F05EA : f32
    %171 = vector.broadcast %cst_65 : f32 to vector<8x512xf32>
    %172 = arith.addf %170, %171 : vector<8x512xf32>
    %173 = arith.mulf %172, %153 : vector<8x512xf32>
    %cst_66 = arith.constant 0x4B2B9D51 : f32
    %174 = vector.broadcast %cst_66 : f32 to vector<8x512xf32>
    %175 = arith.addf %173, %174 : vector<8x512xf32>
    %176 = arith.mulf %175, %153 : vector<8x512xf32>
    %cst_67 = arith.constant 0x4B220ADA : f32
    %177 = vector.broadcast %cst_67 : f32 to vector<8x512xf32>
    %178 = arith.addf %176, %177 : vector<8x512xf32>
    %cst_68 = arith.constant 1.000000e+00 : f32
    %179 = vector.broadcast %cst_68 : f32 to vector<8x512xf32>
    %180 = arith.mulf %153, %179 : vector<8x512xf32>
    %cst_69 = arith.constant 3.600000e+01 : f32
    %181 = vector.broadcast %cst_69 : f32 to vector<8x512xf32>
    %182 = arith.addf %180, %181 : vector<8x512xf32>
    %183 = arith.mulf %182, %153 : vector<8x512xf32>
    %cst_70 = arith.constant 5.460000e+02 : f32
    %184 = vector.broadcast %cst_70 : f32 to vector<8x512xf32>
    %185 = arith.addf %183, %184 : vector<8x512xf32>
    %186 = arith.mulf %185, %153 : vector<8x512xf32>
    %cst_71 = arith.constant 4.536000e+03 : f32
    %187 = vector.broadcast %cst_71 : f32 to vector<8x512xf32>
    %188 = arith.addf %186, %187 : vector<8x512xf32>
    %189 = arith.mulf %188, %153 : vector<8x512xf32>
    %cst_72 = arith.constant 2.244900e+04 : f32
    %190 = vector.broadcast %cst_72 : f32 to vector<8x512xf32>
    %191 = arith.addf %189, %190 : vector<8x512xf32>
    %192 = arith.mulf %191, %153 : vector<8x512xf32>
    %cst_73 = arith.constant 6.728400e+04 : f32
    %193 = vector.broadcast %cst_73 : f32 to vector<8x512xf32>
    %194 = arith.addf %192, %193 : vector<8x512xf32>
    %195 = arith.mulf %194, %153 : vector<8x512xf32>
    %cst_74 = arith.constant 1.181240e+05 : f32
    %196 = vector.broadcast %cst_74 : f32 to vector<8x512xf32>
    %197 = arith.addf %195, %196 : vector<8x512xf32>
    %198 = arith.mulf %197, %153 : vector<8x512xf32>
    %cst_75 = arith.constant 1.095840e+05 : f32
    %199 = vector.broadcast %cst_75 : f32 to vector<8x512xf32>
    %200 = arith.addf %198, %199 : vector<8x512xf32>
    %201 = arith.mulf %200, %153 : vector<8x512xf32>
    %cst_76 = arith.constant 4.032000e+04 : f32
    %202 = vector.broadcast %cst_76 : f32 to vector<8x512xf32>
    %203 = arith.addf %201, %202 : vector<8x512xf32>
    %204 = arith.divf %178, %203 : vector<8x512xf32>
    %205 = arith.addf %87, %151 : vector<8x512xf32>
    %206 = arith.subf %205, %21 : vector<8x512xf32>
    %207 = arith.mulf %140, %204 : vector<8x512xf32>
    %208 = arith.divf %207, %74 : vector<8x512xf32>
    %209 = math.log %208 : vector<8x512xf32>
    %210 = arith.addf %206, %209 : vector<8x512xf32>
    %211 = arith.addf %6, %7 : vector<8x512xf32>
    %212 = arith.divf %3, %9 : vector<8x512xf32>
    %213 = math.log1p %212 : vector<8x512xf32>
    %214 = arith.mulf %211, %213 : vector<8x512xf32>
    %cst_77 = arith.constant 1.000000e-10 : f32
    %215 = vector.broadcast %cst_77 : f32 to vector<8x512xf32>
    %216 = arith.addf %3, %215 : vector<8x512xf32>
    %217 = arith.divf %9, %216 : vector<8x512xf32>
    %218 = math.log %217 : vector<8x512xf32>
    %219 = arith.mulf %7, %218 : vector<8x512xf32>
    %220 = arith.addf %214, %219 : vector<8x512xf32>
    %221 = arith.addf %210, %220 : vector<8x512xf32>
    %c0_78 = arith.constant 0 : index
    %c0_79 = arith.constant 0 : index
    %222 = vector.load %arg6[%c0_78, %c0_79] : memref<8x1xf32, #tpu.memory_space<vmem>>, vector<8x1xf32>
    %cst_80 = arith.constant dense<0.000000e+00> : vector<8xf32>
    %223 = vector.multi_reduction <add>, %221, %cst_80 [1] : vector<8x512xf32> to vector<8xf32>
    %224 = vector.shape_cast %223 : vector<8xf32> to vector<8x1xf32>
    %225 = arith.addf %222, %224 : vector<8x1xf32>
    %c0_81 = arith.constant 0 : index
    %c0_82 = arith.constant 0 : index
    %226 = vector.load %arg6[%c0_81, %c0_82] : memref<8x1xf32, #tpu.memory_space<vmem>>, vector<8x1xf32>
    tpu.vector_store %arg6[%c0_81, %c0_82], %225 {strides = array<i32>} : memref<8x1xf32, #tpu.memory_space<vmem>>, vector<8x1xf32>,
    %227 = tpu.iota {dimensions = array<i32: 0>} : vector<8x512xi32>
    %c7_i32 = arith.constant 7 : i32
    %228 = vector.broadcast %c7_i32 : i32 to vector<8x512xi32>
    %229 = arith.cmpi slt, %227, %228 : vector<8x512xi32>
    %230 = math.absf %3 : vector<8x512xf32>
    %cst_83 = arith.constant 0.000000e+00 : f32
    %231 = vector.broadcast %cst_83 : f32 to vector<8x512xf32>
    %232 = arith.select %229, %230, %231 : vector<8x512xi1>, vector<8x512xf32>
    %c0_84 = arith.constant 0 : index
    %c0_85 = arith.constant 0 : index
    %233 = vector.load %arg7[%c0_84, %c0_85] : memref<8x1xf32, #tpu.memory_space<vmem>>, vector<8x1xf32>
    %cst_86 = arith.constant dense<0.000000e+00> : vector<8xf32>
    %234 = vector.multi_reduction <add>, %232, %cst_86 [1] : vector<8x512xf32> to vector<8xf32>
    %235 = vector.shape_cast %234 : vector<8xf32> to vector<8x1xf32>
    %236 = arith.addf %233, %235 : vector<8x1xf32>
    %c0_87 = arith.constant 0 : index
    %c0_88 = arith.constant 0 : index
    %237 = vector.load %arg7[%c0_87, %c0_88] : memref<8x1xf32, #tpu.memory_space<vmem>>, vector<8x1xf32>
    tpu.vector_store %arg7[%c0_87, %c0_88], %236 {strides = array<i32>} : memref<8x1xf32, #tpu.memory_space<vmem>>, vector<8x1xf32>,
    %c1_i32 = arith.constant 1 : i32
    %238 = arith.cmpi eq, %arg1, %c1_i32 : i32
    %239 = arith.extui %238 : i1 to i32
    %c0_i32_89 = arith.constant 0 : i32
    %240 = arith.cmpi ne, %239, %c0_i32_89 : i32
    scf.if %240 {
      %c0_90 = arith.constant 0 : index
      %c0_91 = arith.constant 0 : index
      %241 = vector.load %arg6[%c0_90, %c0_91] : memref<8x1xf32, #tpu.memory_space<vmem>>, vector<8x1xf32>
      %cst_92 = arith.constant dense<0.000000e+00> : vector<1xf32>
      %242 = vector.multi_reduction <add>, %241, %cst_92 [0] : vector<8x1xf32> to vector<1xf32>
      %243 = vector.shape_cast %242 : vector<1xf32> to vector<1x1xf32>
      %cst_93 = arith.constant 6.10351563E-5 : f32
      %244 = vector.broadcast %cst_93 : f32 to vector<1x1xf32>
      %245 = arith.mulf %243, %244 : vector<1x1xf32>
      %c0_94 = arith.constant 0 : index
      %c0_95 = arith.constant 0 : index
      %246 = vector.load %arg7[%c0_94, %c0_95] : memref<8x1xf32, #tpu.memory_space<vmem>>, vector<8x1xf32>
      %cst_96 = arith.constant dense<0.000000e+00> : vector<1xf32>
      %247 = vector.multi_reduction <add>, %246, %cst_96 [0] : vector<8x1xf32> to vector<1xf32>
      %248 = vector.shape_cast %247 : vector<1xf32> to vector<1x1xf32>
      %cst_97 = arith.constant 0.00999999977 : f32
      %249 = vector.broadcast %cst_97 : f32 to vector<1x1xf32>
      %250 = arith.mulf %249, %248 : vector<1x1xf32>
      %251 = arith.addf %245, %250 : vector<1x1xf32>
      %252 = vector.shape_cast %251 : vector<1x1xf32> to vector<1x1x1xf32>
      %c0_98 = arith.constant 0 : index
      %c0_99 = arith.constant 0 : index
      %c0_100 = arith.constant 0 : index
      %253 = vector.load %arg5[%c0_98, %c0_99, %c0_100] : memref<1x1x1xf32, #tpu.memory_space<vmem>>, vector<1x1x1xf32>
      tpu.vector_store %arg5[%c0_98, %c0_99, %c0_100], %252 {strides = array<i32>} : memref<1x1x1xf32, #tpu.memory_space<vmem>>, vector<1x1x1xf32>,
    } else {
    }
    return
  }
  func.func @transform_0(%arg0: i32, %arg1: i32) -> (i32, i32) {
    %c2_i32 = arith.constant 2 : i32
    %0 = arith.muli %arg0, %c2_i32 : i32
    %1 = arith.addi %0, %arg1 : i32
    %c0_i32 = arith.constant 0 : i32
    %c0_i32_0 = arith.constant 0 : i32
    return %c0_i32, %1 : i32, i32
  }
  func.func @transform_1(%arg0: i32, %arg1: i32) -> (i32, i32) {
    %c2_i32 = arith.constant 2 : i32
    %0 = arith.muli %arg0, %c2_i32 : i32
    %1 = arith.addi %0, %arg1 : i32
    %c0_i32 = arith.constant 0 : i32
    %c0_i32_0 = arith.constant 0 : i32
    return %c0_i32, %1 : i32, i32
  }
  func.func @transform_2(%arg0: i32, %arg1: i32) -> (i32, i32) {
    %c2_i32 = arith.constant 2 : i32
    %0 = arith.muli %arg0, %c2_i32 : i32
    %1 = arith.addi %0, %arg1 : i32
    %c0_i32 = arith.constant 0 : i32
    %c0_i32_0 = arith.constant 0 : i32
    return %c0_i32, %1 : i32, i32
  }
  func.func @transform_3(%arg0: i32, %arg1: i32) -> (i32, i32, i32) {
    %c0_i32 = arith.constant 0 : i32
    %c0_i32_0 = arith.constant 0 : i32
    %c0_i32_1 = arith.constant 0 : i32
    return %arg0, %c0_i32, %c0_i32_0 : i32, i32, i32
  }
}

</mosaic_0001>

<llo_original>
// kernel: tpu_custom_call.1
$region0: #{tpu_custom_call.1}
  #allocation0 [shape = 'u32[]', space=smem, size = 0x4, offset = 0x4, fixed_abs, tag = 'smem constant byte address 0x4 - core index']
  #allocation1 [shape = 'u32[72,128]{1,0:T(1,128)}', space=vmem, size = 0x9000, scoped, tag = 'internal scratch']
  #allocation2 [shape = 'f32[8,1]{1,0:T(8,128)}', space=vmem, size = 0x1000, scoped, tag = 'scratch operand']
  #allocation3 [shape = 'f32[8,1]{1,0:T(8,128)}', space=vmem, size = 0x1000, scoped, tag = 'scratch operand']
  %s0 = inlined_call_operand.hbm [shape: f32[8,2048], index: 0, kind: input, shape index: {}]
  %s1 = inlined_call_operand.hbm [shape: f32[8,2048], index: 1, kind: input, shape index: {}]
  %s2 = inlined_call_operand.hbm [shape: f32[8,2048], index: 2, kind: input, shape index: {}]
  %s3 = inlined_call_operand.vmem [shape: f32[2,1,1], index: 3, kind: output, shape index: {}]
  %s4 = sld [smem:[#allocation0]]
  $region65: #{tpu_custom_call.1} parent=0
    _
  %s6 = ssub.s32 1, %s4
  %s7 = scalar_select 0, %s6, %s4
  $region1: #{tpu_custom_call.1} parent=0
    #allocation4 [shape = 'u8[32768]{0}', space=vmem, size = 0x8000, scoped, tag = 'input window, operand 0']
    #allocation5 [shape = 's32[2]{0}', space=sflag, size = 0x8, scoped, tag = 'scoped memory for tpu_custom_call.1']
    #allocation6 [shape = 'u8[32768]{0}', space=vmem, size = 0x8000, scoped, tag = 'input window, operand 1']
    #allocation7 [shape = 's32[2]{0}', space=sflag, size = 0x8, scoped, tag = 'scoped memory for tpu_custom_call.1']
    #allocation8 [shape = 'u8[32768]{0}', space=vmem, size = 0x8000, scoped, tag = 'input window, operand 2']
    %8 = vsyncpa [#allocation5], 0
    %s9 = scalar_lea.sflag [#allocation5], 1
    %10 = vsyncpa %s9, 0
    %11 = vsyncpa [#allocation7], 0
    %s12 = scalar_lea.sflag [#allocation7], 1
    %13 = vsyncpa %s12, 0
    loop: start=0, step=1, limit=6
    $region2: #{tpu_custom_call.1} parent=1 // loop_pre_header
      _
    $region3: #{tpu_custom_call.1} parent=1 // loop_header
      %s15 = sphi 0, %s19
      %p16 = scmp.ge.s32.totalorder %s15, 6
      %s22 = sphi 0, %s34
      %s23 = sphi 0, %s30
      %s24 = sphi 0, %s22
      %s25 = sphi 0, %s23
      %s26 = sphi 0, %s24
      %s27 = sphi 0, %s25
      %s41 = sphi 0, %s43
      %s44 = sphi 0, %s41
      %s45 = sphi 0, %s44
      %s61 = sphi 0, %s45
      %s71 = sphi 0, %s73
      %s74 = sphi 0, %s71
      %s75 = sphi 0, %s74
      %s91 = sphi 0, %s75
      %s101 = sphi 0, %s103
      %s104 = sphi 0, %s101
      %s105 = sphi 0, %s104
      %s121 = sphi 0, %s105
      %s127 = sphi 0, %s129
      %s130 = sphi 0, %s127
      %s131 = sphi 0, %s130
      %s147 = sphi 0, %s131
    $region4: #{tpu_custom_call.1} parent=1 // loop_header_branch
      %18 = sbr.rel (%p16) target = $region8
    $region5: #{tpu_custom_call.1} parent=1 // loop_body
      %s20 = ssub.s32 %s15, 1
      %s21 = ssub.s32 %s15, 2
      %s28 = sadd.s32 1, %s23
      %p29 = scmp.ge.s32.totalorder %s28, 2
      %s30 = scalar_select %p29, 0, %s28
      %s31 = sadd.s32 1, %s22
      %s32 = scalar_select %p29, %s31, %s22
      %p33 = scmp.ge.s32.totalorder %s32, 2
      %s34 = scalar_select %p33, 0, %s32
      %s35 = smul.u32 %s22, 2
      %s36 = sadd.s32 %s35, %s23
      %s37 = smul.u32 %s34, 2
      %s38 = sadd.s32 %s37, %s30
      %s39 = ssub.s32 %s36, %s38
      %p40 = scmp.eq.s32.totalorder %s39, 0
      %s42 = sadd.s32 %s41, 1
      %s43 = scalar_select %p40, %s41, %s42
      %p46 = pneg %p40
      %p47 = scmp.eq.s32.totalorder %s15, 3
      %p48 = por %p46, %p47
      %p49 = scmp.ne.s32.totalorder %s41, %s44
      %p50 = scmp.eq.s32.totalorder %s15, 0
      %p51 = por %p49, %p50
      %p52 = scmp.ne.s32.totalorder %s41, %s44
      %p53 = scmp.eq.s32.totalorder %s20, 3
      %p54 = por %p52, %p53
      %p55 = scmp.ne.s32.totalorder %s44, %s45
      %p56 = scmp.eq.s32.totalorder %s20, 0
      %p57 = por %p55, %p56
      %p58 = scmp.ne.s32.totalorder %s44, %s45
      %p59 = scmp.eq.s32.totalorder %s21, 3
      %p60 = por %p58, %p59
      %p62 = scmp.ne.s32.totalorder %s45, %s61
      %p63 = scmp.eq.s32.totalorder %s21, 0
      %p64 = por %p62, %p63
      %s65 = smul.u32 %s22, 2
      %s66 = sadd.s32 %s65, %s23
      %s67 = smul.u32 %s34, 2
      %s68 = sadd.s32 %s67, %s30
      %s69 = ssub.s32 %s66, %s68
      %p70 = scmp.eq.s32.totalorder %s69, 0
      %s72 = sadd.s32 %s71, 1
      %s73 = scalar_select %p70, %s71, %s72
      %p76 = pneg %p70
      %p77 = scmp.eq.s32.totalorder %s15, 3
      %p78 = por %p76, %p77
      %p79 = scmp.ne.s32.totalorder %s71, %s74
      %p80 = scmp.eq.s32.totalorder %s15, 0
      %p81 = por %p79, %p80
      %p82 = scmp.ne.s32.totalorder %s71, %s74
      %p83 = scmp.eq.s32.totalorder %s20, 3
      %p84 = por %p82, %p83
      %p85 = scmp.ne.s32.totalorder %s74, %s75
      %p86 = scmp.eq.s32.totalorder %s20, 0
      %p87 = por %p85, %p86
      %p88 = scmp.ne.s32.totalorder %s74, %s75
      %p89 = scmp.eq.s32.totalorder %s21, 3
      %p90 = por %p88, %p89
      %p92 = scmp.ne.s32.totalorder %s75, %s91
      %p93 = scmp.eq.s32.totalorder %s21, 0
      %p94 = por %p92, %p93
      %s95 = smul.u32 %s22, 2
      %s96 = sadd.s32 %s95, %s23
      %s97 = smul.u32 %s34, 2
      %s98 = sadd.s32 %s97, %s30
      %s99 = ssub.s32 %s96, %s98
      %p100 = scmp.eq.s32.totalorder %s99, 0
      %s102 = sadd.s32 %s101, 1
      %s103 = scalar_select %p100, %s101, %s102
      %p106 = pneg %p100
      %p107 = scmp.eq.s32.totalorder %s15, 3
      %p108 = por %p106, %p107
      %p109 = scmp.ne.s32.totalorder %s101, %s104
      %p110 = scmp.eq.s32.totalorder %s15, 0
      %p111 = por %p109, %p110
      %p112 = scmp.ne.s32.totalorder %s101, %s104
      %p113 = scmp.eq.s32.totalorder %s20, 3
      %p114 = por %p112, %p113
      %p115 = scmp.ne.s32.totalorder %s104, %s105
      %p116 = scmp.eq.s32.totalorder %s20, 0
      %p117 = por %p115, %p116
      %p118 = scmp.ne.s32.totalorder %s104, %s105
      %p119 = scmp.eq.s32.totalorder %s21, 3
      %p120 = por %p118, %p119
      %p122 = scmp.ne.s32.totalorder %s105, %s121
      %p123 = scmp.eq.s32.totalorder %s21, 0
      %p124 = por %p122, %p123
      %s125 = ssub.s32 %s22, %s34
      %p126 = scmp.eq.s32.totalorder %s125, 0
      %s128 = sadd.s32 %s127, 1
      %s129 = scalar_select %p126, %s127, %s128
      %p132 = pneg %p126
      %p133 = scmp.eq.s32.totalorder %s15, 3
      %p134 = por %p132, %p133
      %p135 = scmp.ne.s32.totalorder %s127, %s130
      %p136 = scmp.eq.s32.totalorder %s15, 0
      %p137 = por %p135, %p136
      %p138 = scmp.ne.s32.totalorder %s127, %s130
      %p139 = scmp.eq.s32.totalorder %s20, 3
      %p140 = por %p138, %p139
      %p141 = scmp.ne.s32.totalorder %s130, %s131
      %p142 = scmp.eq.s32.totalorder %s20, 0
      %p143 = por %p141, %p142
      %p144 = scmp.ne.s32.totalorder %s130, %s131
      %p145 = scmp.eq.s32.totalorder %s21, 3
      %p146 = por %p144, %p145
      %p148 = scmp.ne.s32.totalorder %s131, %s147
      %p149 = scmp.eq.s32.totalorder %s21, 0
      %p150 = por %p148, %p149
      %p151 = scmp.le.s32.totalorder 1, %s15
      %p152 = scmp.lt.s32.totalorder %s15, 5
      %p153 = pnand %p151, %p152
      %p154 = pneg %p153
      // Predicated region
      $region9: #{tpu_custom_call.1} parent=5 // pred_check
        _
      $region10: #{tpu_custom_call.1} parent=5 // pred_check_branch
        %156 = sbr.rel (%p153) target = $region12
      $region11: #{tpu_custom_call.1} parent=5 // pred_region
        %s157 = ssub.s32 %s15, 1
      $region12: #{tpu_custom_call.1} parent=5 // pred_fallthru
        _
      %p158 = scmp.lt.s32.totalorder %s15, 4
      // Predicated region
      $region13: #{tpu_custom_call.1} parent=5 // pred_check
        %p159 = pneg %p158
      $region14: #{tpu_custom_call.1} parent=5 // pred_check_branch
        %161 = sbr.rel (%p159) target = $region16
      $region15: #{tpu_custom_call.1} parent=5 // pred_region
        // Predicated region
        $region17: #{tpu_custom_call.1} parent=15 // pred_check
          %p162 = pneg %p51
        $region18: #{tpu_custom_call.1} parent=15 // pred_check_branch
          %164 = sbr.rel (%p162) target = $region20
        $region19: #{tpu_custom_call.1} parent=15 // pred_region
          %s165 = sand.u32 %s41, 1
          %s166 = scalar_lea.sflag [#allocation5], %s165
          %s167 = sand.u32 %s41, 1
          %s168 = smul.addr %s167, 32
          %s169 = scalar_lea.vmem [#allocation4], %s168
          %s170 = smul.u32 %s22, 2
          %s171 = sadd.s32 %s170, %s23
          %s172 = smul.u32 4, %s171
          %174 = vsyncadd %s166, 0
          %s175 = smul.addr %s172, 8
          %s176 = scalar_lea.hbm %s0, %s175
          %s178 = sshll.u32 %s176, 4
          %s179 = int_to_ptr.hbm [resolvable:$true] %s178
          %s180 = sshll.u32 %s169, 4
          %s181 = int_to_ptr.vmem [resolvable:$true] %s180
          %183 = dma.hbm_to_vmem [thread:$0]  %s179, 512, %s181, %s166
        $region20: #{tpu_custom_call.1} parent=15 // pred_fallthru
          _
        // Predicated region
        $region21: #{tpu_custom_call.1} parent=15 // pred_check
          %p184 = pneg %p81
        $region22: #{tpu_custom_call.1} parent=15 // pred_check_branch
          %186 = sbr.rel (%p184) target = $region24
        $region23: #{tpu_custom_call.1} parent=15 // pred_region
          %s187 = sand.u32 %s15, 1
          %s188 = scalar_lea.sflag [#allocation7], %s187
          %s189 = sand.u32 %s71, 1
          %s190 = smul.addr %s189, 32
          %s191 = scalar_lea.vmem [#allocation6], %s190
          %s192 = smul.u32 %s22, 2
          %s193 = sadd.s32 %s192, %s23
          %s194 = smul.u32 4, %s193
          %196 = vsyncadd %s188, 0
          %s197 = smul.addr %s194, 8
          %s198 = scalar_lea.hbm %s1, %s197
          %s200 = sshll.u32 %s198, 4
          %s201 = int_to_ptr.hbm [resolvable:$true] %s200
          %s202 = sshll.u32 %s191, 4
          %s203 = int_to_ptr.vmem [resolvable:$true] %s202
          %205 = dma.hbm_to_vmem [thread:$0]  %s201, 512, %s203, %s188
        $region24: #{tpu_custom_call.1} parent=15 // pred_fallthru
          _
        // Predicated region
        $region25: #{tpu_custom_call.1} parent=15 // pred_check
          %p206 = pneg %p111
        $region26: #{tpu_custom_call.1} parent=15 // pred_check_branch
          %208 = sbr.rel (%p206) target = $region28
        $region27: #{tpu_custom_call.1} parent=15 // pred_region
          %s209 = sand.u32 %s15, 1
          %s210 = scalar_lea.sflag [#allocation7], %s209
          %s211 = sand.u32 %s101, 1
          %s212 = smul.addr %s211, 32
          %s213 = scalar_lea.vmem [#allocation8], %s212
          %s214 = smul.u32 %s22, 2
          %s215 = sadd.s32 %s214, %s23
          %s216 = smul.u32 4, %s215
          %218 = vsyncadd %s210, 0
          %s219 = smul.addr %s216, 8
          %s220 = scalar_lea.hbm %s2, %s219
          %s222 = sshll.u32 %s220, 4
          %s223 = int_to_ptr.hbm [resolvable:$true] %s222
          %s224 = sshll.u32 %s213, 4
          %s225 = int_to_ptr.vmem [resolvable:$true] %s224
          %227 = dma.hbm_to_vmem [thread:$0]  %s223, 512, %s225, %s210
        $region28: #{tpu_custom_call.1} parent=15 // pred_fallthru
          _
      $region16: #{tpu_custom_call.1} parent=5 // pred_fallthru
        _
      %p228 = scmp.le.s32.totalorder 1, %s15
      %p229 = scmp.lt.s32.totalorder %s15, 5
      %p230 = pnand %p228, %p229
      %p231 = pneg %p230
      // Predicated region
      $region29: #{tpu_custom_call.1} parent=5 // pred_check
        _
      $region30: #{tpu_custom_call.1} parent=5 // pred_check_branch
        %233 = sbr.rel (%p230) target = $region32
      $region31: #{tpu_custom_call.1} parent=5 // pred_region
        %s234 = ssub.s32 %s15, 1
        %s235 = sand.u32 %s44, 1
        %s236 = scalar_lea.sflag [#allocation5], %s235
        %s237 = sand.u32 %s44, 1
        %s238 = smul.addr %s237, 32
        %s239 = scalar_lea.vmem [#allocation4], %s238
        // Predicated region
        $region33: #{tpu_custom_call.1} parent=31 // pred_check
          %p240 = pneg %p57
        $region34: #{tpu_custom_call.1} parent=31 // pred_check_branch
          %242 = sbr.rel (%p240) target = $region36
        $region35: #{tpu_custom_call.1} parent=31 // pred_region
          %244 = dma.done %s236, 512
        $region36: #{tpu_custom_call.1} parent=31 // pred_fallthru
          _
        %s245 = sand.u32 %s20, 1
        %s246 = scalar_lea.sflag [#allocation7], %s245
        %s247 = sand.u32 %s74, 1
        %s248 = smul.addr %s247, 32
        %s249 = scalar_lea.vmem [#allocation6], %s248
        // Predicated region
        $region37: #{tpu_custom_call.1} parent=31 // pred_check
          %p250 = pneg %p87
        $region38: #{tpu_custom_call.1} parent=31 // pred_check_branch
          %252 = sbr.rel (%p250) target = $region40
        $region39: #{tpu_custom_call.1} parent=31 // pred_region
          %254 = dma.done %s246, 512
        $region40: #{tpu_custom_call.1} parent=31 // pred_fallthru
          _
        %s255 = sand.u32 %s20, 1
        %s256 = scalar_lea.sflag [#allocation7], %s255
        %s257 = sand.u32 %s104, 1
        %s258 = smul.addr %s257, 32
        %s259 = scalar_lea.vmem [#allocation8], %s258
        // Predicated region
        $region41: #{tpu_custom_call.1} parent=31 // pred_check
          %p260 = pneg %p117
        $region42: #{tpu_custom_call.1} parent=31 // pred_check_branch
          %262 = sbr.rel (%p260) target = $region44
        $region43: #{tpu_custom_call.1} parent=31 // pred_region
          %264 = dma.done %s256, 512
        $region44: #{tpu_custom_call.1} parent=31 // pred_fallthru
          _
        %s265 = sand.u32 %s44, 1
        %s266 = scalar_lea.sflag [#allocation5], %s265
        %s267 = sand.u32 %s44, 1
        %s268 = smul.addr %s267, 32
        %s269 = scalar_lea.vmem [#allocation4], %s268
        %p270 = pneg %p57
        %p271 = pneg %p54
        %s272 = sand.u32 %s20, 1
        %s273 = scalar_lea.sflag [#allocation7], %s272
        %s274 = sand.u32 %s74, 1
        %s275 = smul.addr %s274, 32
        %s276 = scalar_lea.vmem [#allocation6], %s275
        %p277 = pneg %p87
        %p278 = pneg %p84
        %s279 = sand.u32 %s20, 1
        %s280 = scalar_lea.sflag [#allocation7], %s279
        %s281 = sand.u32 %s104, 1
        %s282 = smul.addr %s281, 32
        %s283 = scalar_lea.vmem [#allocation8], %s282
        %p284 = pneg %p117
        %p285 = pneg %p114
        %p286 = pneg %p143
        %p287 = pneg %p140
        %p288 = scmp.lt.s32.totalorder %s24, 1
        %s289 = scalar_select %p288, %s24, 1
        %s290 = scalar_lea.vmem %s3, %s289
        %s291 = smul.u32 %s24, 2
        %s292 = sadd.s32 %s291, %s25
        %s293 = smul.u32 4, %s292
        %s294 = smul.u32 %s24, 2
        %s295 = sadd.s32 %s294, %s25
        %s296 = smul.u32 4, %s295
        %s297 = smul.u32 %s24, 2
        %s298 = sadd.s32 %s297, %s25
        %s299 = smul.u32 4, %s298
        %p300 = scmp.lt.s32.totalorder %s24, 1
        %s301 = scalar_select %p300, %s24, 1
        %s302 = scalar_lea.vmem %s3, %s301
        %p303 = scmp.eq.s32.totalorder %s25, 0
        // Predicated region
        $region45: #{tpu_custom_call.1} parent=31 // pred_check
          %p304 = pneg %p303
        $region46: #{tpu_custom_call.1} parent=31 // pred_check_branch
          %306 = sbr.rel (%p304) target = $region48
        $region47: #{tpu_custom_call.1} parent=31 // pred_region
          %vm307 = vcmask 7168
          %308 = vst.msk [vmem:[#allocation2] sm:$0xff] %vm307, 0.0
          %309 = vst.msk [vmem:[#allocation3] sm:$0xff] %vm307, 0.0
        $region48: #{tpu_custom_call.1} parent=31 // pred_fallthru
          _
        %v310 = vld [vmem:[%s239] sm:$0xff]
        %v311 = vld [vmem:[%s239 + $0x8] sm:$0xff]
        %v312 = vld [vmem:[%s239 + $0x10] sm:$0xff]
        %v313 = vld [vmem:[%s239 + $0x18] sm:$0xff]
        %v314 = vld [vmem:[%s249] sm:$0xff]
        %v315 = vld [vmem:[%s249 + $0x8] sm:$0xff]
        %v316 = vld [vmem:[%s249 + $0x10] sm:$0xff]
        %v317 = vld [vmem:[%s249 + $0x18] sm:$0xff]
        %v318 = vmin.f32 %v314, 1000000.0
        %v319 = vmin.f32 %v315, 1000000.0
        %v320 = vmin.f32 %v316, 1000000.0
        %v321 = vmin.f32 %v317, 1000000.0
        %v322 = vld [vmem:[%s259] sm:$0xff]
        %v323 = vld [vmem:[%s259 + $0x8] sm:$0xff]
        %v324 = vld [vmem:[%s259 + $0x10] sm:$0xff]
        %v325 = vld [vmem:[%s259 + $0x18] sm:$0xff]
        %v326 = vadd.f32 %v318, 1e-10
        %v327 = vadd.f32 %v319, 1e-10
        %v328 = vadd.f32 %v320, 1e-10
        %v329 = vadd.f32 %v321, 1e-10
        %v330 = vadd.f32 %v322, %v326
        %v331 = vadd.f32 %v323, %v327
        %v332 = vadd.f32 %v324, %v328
        %v333 = vadd.f32 %v325, %v329
        %v334 = vsub.f32 %v330, 1.0
        %v335 = vsub.f32 %v331, 1.0
        %v336 = vsub.f32 %v332, 1.0
        %v337 = vsub.f32 %v333, 1.0
        %v338 = vadd.f32 %v334, 7.5
        %v339 = vadd.f32 %v335, 7.5
        %v340 = vadd.f32 %v336, 7.5
        %v341 = vadd.f32 %v337, 7.5
        %v342 = vadd.f32 %v334, 0.5
        %v343 = vadd.f32 %v335, 0.5
        %v344 = vadd.f32 %v336, 0.5
        %v345 = vadd.f32 %v337, 0.5
        %v346 = vlog2.pop %v338
        %v347 = vmul.f32 %v346, 0.6931472
        %v348 = vlog2.pop %v339
        %v349 = vmul.f32 %v348, 0.6931472
        %v350 = vlog2.pop %v340
        %v351 = vmul.f32 %v350, 0.6931472
        %v352 = vlog2.pop %v341
        %v353 = vmul.f32 %v352, 0.6931472
        %v354 = vmul.f32 %v342, %v347
        %v355 = vmul.f32 %v343, %v349
        %v356 = vmul.f32 %v344, %v351
        %v357 = vmul.f32 %v345, %v353
        %v358 = vadd.f32 %v354, 0.9189385
        %v359 = vadd.f32 %v355, 0.9189385
        %v360 = vadd.f32 %v356, 0.9189385
        %v361 = vadd.f32 %v357, 0.9189385
        %v362 = vsub.f32 %v358, %v338
        %v363 = vsub.f32 %v359, %v339
        %v364 = vsub.f32 %v360, %v340
        %v365 = vsub.f32 %v361, %v341
        %v366 = vmin.f32 %v334, 16384.0
        %v367 = vmin.f32 %v335, 16384.0
        %v368 = vmin.f32 %v336, 16384.0
        %v369 = vmin.f32 %v337, 16384.0
        %v370 = vadd.f32 %v366, 60.458332
        %v371 = vadd.f32 %v367, 60.458332
        %v372 = vadd.f32 %v368, 60.458332
        %v373 = vadd.f32 %v369, 60.458332
        %v374 = vmul.f32 %v370, %v366
        %v375 = vmul.f32 %v371, %v367
        %v376 = vmul.f32 %v372, %v368
        %v377 = vmul.f32 %v373, %v369
        %v378 = vadd.f32 %v374, 1599.0425
        %v379 = vadd.f32 %v375, 1599.0425
        %v380 = vadd.f32 %v376, 1599.0425
        %v381 = vadd.f32 %v377, 1599.0425
        %v382 = vmul.f32 %v378, %v366
        %v383 = vmul.f32 %v379, %v367
        %v384 = vmul.f32 %v380, %v368
        %v385 = vmul.f32 %v381, %v369
        %v386 = vadd.f32 %v382, 24165.51
        %v387 = vadd.f32 %v383, 24165.51
        %v388 = vadd.f32 %v384, 24165.51
        %v389 = vadd.f32 %v385, 24165.51
        %v390 = vmul.f32 %v386, %v366
        %v391 = vmul.f32 %v387, %v367
        %v392 = vmul.f32 %v388, %v368
        %v393 = vmul.f32 %v389, %v369
        %v394 = vadd.f32 %v390, 228235.22
        %v395 = vadd.f32 %v391, 228235.22
        %v396 = vadd.f32 %v392, 228235.22
        %v397 = vadd.f32 %v393, 228235.22
        %v398 = vmul.f32 %v394, %v366
        %v399 = vmul.f32 %v395, %v367
        %v400 = vmul.f32 %v396, %v368
        %v401 = vmul.f32 %v397, %v369
        %v402 = vadd.f32 %v398, 1379496.3
        %v403 = vadd.f32 %v399, 1379496.3
        %v404 = vadd.f32 %v400, 1379496.3
        %v405 = vadd.f32 %v401, 1379496.3
        %v406 = vmul.f32 %v402, %v366
        %v407 = vmul.f32 %v403, %v367
        %v408 = vmul.f32 %v404, %v368
        %v409 = vmul.f32 %v405, %v369
        %v410 = vadd.f32 %v406, 5210869.0
        %v411 = vadd.f32 %v407, 5210869.0
        %v412 = vadd.f32 %v408, 5210869.0
        %v413 = vadd.f32 %v409, 5210869.0
        %v414 = vmul.f32 %v410, %v366
        %v415 = vmul.f32 %v411, %v367
        %v416 = vmul.f32 %v412, %v368
        %v417 = vmul.f32 %v413, %v369
        %v418 = vadd.f32 %v414, 11246929.0
        %v419 = vadd.f32 %v415, 11246929.0
        %v420 = vadd.f32 %v416, 11246929.0
        %v421 = vadd.f32 %v417, 11246929.0
        %v422 = vmul.f32 %v418, %v366
        %v423 = vmul.f32 %v419, %v367
        %v424 = vmul.f32 %v420, %v368
        %v425 = vmul.f32 %v421, %v369
        %v426 = vadd.f32 %v422, 10619610.0
        %v427 = vadd.f32 %v423, 10619610.0
        %v428 = vadd.f32 %v424, 10619610.0
        %v429 = vadd.f32 %v425, 10619610.0
        %v430 = vadd.f32 %v366, 36.0
        %v431 = vadd.f32 %v367, 36.0
        %v432 = vadd.f32 %v368, 36.0
        %v433 = vadd.f32 %v369, 36.0
        %v434 = vmul.f32 %v430, %v366
        %v435 = vmul.f32 %v431, %v367
        %v436 = vmul.f32 %v432, %v368
        %v437 = vmul.f32 %v433, %v369
        %v438 = vadd.f32 %v434, 546.0
        %v439 = vadd.f32 %v435, 546.0
        %v440 = vadd.f32 %v436, 546.0
        %v441 = vadd.f32 %v437, 546.0
        %v442 = vmul.f32 %v438, %v366
        %v443 = vmul.f32 %v439, %v367
        %v444 = vmul.f32 %v440, %v368
        %v445 = vmul.f32 %v441, %v369
        %v446 = vadd.f32 %v442, 4536.0
        %v447 = vadd.f32 %v443, 4536.0
        %v448 = vadd.f32 %v444, 4536.0
        %v449 = vadd.f32 %v445, 4536.0
        %v450 = vmul.f32 %v446, %v366
        %v451 = vmul.f32 %v447, %v367
        %v452 = vmul.f32 %v448, %v368
        %v453 = vmul.f32 %v449, %v369
        %v454 = vadd.f32 %v450, 22449.0
        %v455 = vadd.f32 %v451, 22449.0
        %v456 = vadd.f32 %v452, 22449.0
        %v457 = vadd.f32 %v453, 22449.0
        %v458 = vmul.f32 %v454, %v366
        %v459 = vmul.f32 %v455, %v367
        %v460 = vmul.f32 %v456, %v368
        %v461 = vmul.f32 %v457, %v369
        %v462 = vadd.f32 %v458, 67284.0
        %v463 = vadd.f32 %v459, 67284.0
        %v464 = vadd.f32 %v460, 67284.0
        %v465 = vadd.f32 %v461, 67284.0
        %v466 = vmul.f32 %v462, %v366
        %v467 = vmul.f32 %v463, %v367
        %v468 = vmul.f32 %v464, %v368
        %v469 = vmul.f32 %v465, %v369
        %v470 = vadd.f32 %v466, 118124.0
        %v471 = vadd.f32 %v467, 118124.0
        %v472 = vadd.f32 %v468, 118124.0
        %v473 = vadd.f32 %v469, 118124.0
        %v474 = vmul.f32 %v470, %v366
        %v475 = vmul.f32 %v471, %v367
        %v476 = vmul.f32 %v472, %v368
        %v477 = vmul.f32 %v473, %v369
        %v478 = vadd.f32 %v474, 109584.0
        %v479 = vadd.f32 %v475, 109584.0
        %v480 = vadd.f32 %v476, 109584.0
        %v481 = vadd.f32 %v477, 109584.0
        %v482 = vmul.f32 %v478, %v366
        %v483 = vmul.f32 %v479, %v367
        %v484 = vmul.f32 %v480, %v368
        %v485 = vmul.f32 %v481, %v369
        %v486 = vadd.f32 %v482, 40320.0
        %v487 = vadd.f32 %v483, 40320.0
        %v488 = vadd.f32 %v484, 40320.0
        %v489 = vadd.f32 %v485, 40320.0
        %v490 = vrcp.pop %v486
        %v491 = vmul.f32 %v486, %v490
        %v492 = vsub.f32 1.0, %v491
        %v493 = vmul.f32 %v490, %v492
        %v494 = vadd.f32 %v490, %v493
        %vm495 = vweird.f32 %v486
        %vm496 = vweird.f32 %v490
        %vm497 = vmor %vm495, %vm496
        %v498 = vsel %vm497, %v490, %v494
        %v499 = vand.u32 2147483647, %v486
        %vm500 = vcmp.eq.f32.partialorder %v499, 8.507059e+37
        %v501 = vand.u32 %v486, 2147483648
        %v502 = vor.u32 1.1754944e-38, %v501
        %v503 = vsel %vm500, %v502, %v498
        %v504 = vmul.f32 %v426, %v503
        %v505 = vrcp.pop %v487
        %v506 = vmul.f32 %v487, %v505
        %v507 = vsub.f32 1.0, %v506
        %v508 = vmul.f32 %v505, %v507
        %v509 = vadd.f32 %v505, %v508
        %vm510 = vweird.f32 %v487
        %vm511 = vweird.f32 %v505
        %vm512 = vmor %vm510, %vm511
        %v513 = vsel %vm512, %v505, %v509
        %v514 = vand.u32 2147483647, %v487
        %vm515 = vcmp.eq.f32.partialorder %v514, 8.507059e+37
        %v516 = vand.u32 %v487, 2147483648
        %v517 = vor.u32 1.1754944e-38, %v516
        %v518 = vsel %vm515, %v517, %v513
        %v519 = vmul.f32 %v427, %v518
        %v520 = vrcp.pop %v488
        %v521 = vmul.f32 %v488, %v520
        %v522 = vsub.f32 1.0, %v521
        %v523 = vmul.f32 %v520, %v522
        %v524 = vadd.f32 %v520, %v523
        %vm525 = vweird.f32 %v488
        %vm526 = vweird.f32 %v520
        %vm527 = vmor %vm525, %vm526
        %v528 = vsel %vm527, %v520, %v524
        %v529 = vand.u32 2147483647, %v488
        %vm530 = vcmp.eq.f32.partialorder %v529, 8.507059e+37
        %v531 = vand.u32 %v488, 2147483648
        %v532 = vor.u32 1.1754944e-38, %v531
        %v533 = vsel %vm530, %v532, %v528
        %v534 = vmul.f32 %v428, %v533
        %v535 = vrcp.pop %v489
        %v536 = vmul.f32 %v489, %v535
        %v537 = vsub.f32 1.0, %v536
        %v538 = vmul.f32 %v535, %v537
        %v539 = vadd.f32 %v535, %v538
        %vm540 = vweird.f32 %v489
        %vm541 = vweird.f32 %v535
        %vm542 = vmor %vm540, %vm541
        %v543 = vsel %vm542, %v535, %v539
        %v544 = vand.u32 2147483647, %v489
        %vm545 = vcmp.eq.f32.partialorder %v544, 8.507059e+37
        %v546 = vand.u32 %v489, 2147483648
        %v547 = vor.u32 1.1754944e-38, %v546
        %v548 = vsel %vm545, %v547, %v543
        %v549 = vmul.f32 %v429, %v548
        %v550 = vadd.f32 %v322, 1.0
        %v551 = vadd.f32 %v323, 1.0
        %v552 = vadd.f32 %v324, 1.0
        %v553 = vadd.f32 %v325, 1.0
        %v554 = vsub.f32 %v550, 1.0
        %v555 = vsub.f32 %v551, 1.0
        %v556 = vsub.f32 %v552, 1.0
        %v557 = vsub.f32 %v553, 1.0
        %v558 = vadd.f32 %v554, 7.5
        %v559 = vadd.f32 %v555, 7.5
        %v560 = vadd.f32 %v556, 7.5
        %v561 = vadd.f32 %v557, 7.5
        %v562 = vadd.f32 %v554, 0.5
        %v563 = vadd.f32 %v555, 0.5
        %v564 = vadd.f32 %v556, 0.5
        %v565 = vadd.f32 %v557, 0.5
        %v566 = vlog2.pop %v558
        %v567 = vmul.f32 %v566, 0.6931472
        %v568 = vlog2.pop %v559
        %v569 = vmul.f32 %v568, 0.6931472
        %v570 = vlog2.pop %v560
        %v571 = vmul.f32 %v570, 0.6931472
        %v572 = vlog2.pop %v561
        %v573 = vmul.f32 %v572, 0.6931472
        %v574 = vmul.f32 %v562, %v567
        %v575 = vmul.f32 %v563, %v569
        %v576 = vmul.f32 %v564, %v571
        %v577 = vmul.f32 %v565, %v573
        %v578 = vadd.f32 %v574, 0.9189385
        %v579 = vadd.f32 %v575, 0.9189385
        %v580 = vadd.f32 %v576, 0.9189385
        %v581 = vadd.f32 %v577, 0.9189385
        %v582 = vsub.f32 %v578, %v558
        %v583 = vsub.f32 %v579, %v559
        %v584 = vsub.f32 %v580, %v560
        %v585 = vsub.f32 %v581, %v561
        %v586 = vmin.f32 %v554, 16384.0
        %v587 = vmin.f32 %v555, 16384.0
        %v588 = vmin.f32 %v556, 16384.0
        %v589 = vmin.f32 %v557, 16384.0
        %v590 = vadd.f32 %v586, 60.458332
        %v591 = vadd.f32 %v587, 60.458332
        %v592 = vadd.f32 %v588, 60.458332
        %v593 = vadd.f32 %v589, 60.458332
        %v594 = vmul.f32 %v590, %v586
        %v595 = vmul.f32 %v591, %v587
        %v596 = vmul.f32 %v592, %v588
        %v597 = vmul.f32 %v593, %v589
        %v598 = vadd.f32 %v594, 1599.0425
        %v599 = vadd.f32 %v595, 1599.0425
        %v600 = vadd.f32 %v596, 1599.0425
        %v601 = vadd.f32 %v597, 1599.0425
        %v602 = vmul.f32 %v598, %v586
        %v603 = vmul.f32 %v599, %v587
        %v604 = vmul.f32 %v600, %v588
        %v605 = vmul.f32 %v601, %v589
        %v606 = vadd.f32 %v602, 24165.51
        %v607 = vadd.f32 %v603, 24165.51
        %v608 = vadd.f32 %v604, 24165.51
        %v609 = vadd.f32 %v605, 24165.51
        %v610 = vmul.f32 %v606, %v586
        %v611 = vmul.f32 %v607, %v587
        %v612 = vmul.f32 %v608, %v588
        %v613 = vmul.f32 %v609, %v589
        %v614 = vadd.f32 %v610, 228235.22
        %v615 = vadd.f32 %v611, 228235.22
        %v616 = vadd.f32 %v612, 228235.22
        %v617 = vadd.f32 %v613, 228235.22
        %v618 = vmul.f32 %v614, %v586
        %v619 = vmul.f32 %v615, %v587
        %v620 = vmul.f32 %v616, %v588
        %v621 = vmul.f32 %v617, %v589
        %v622 = vadd.f32 %v618, 1379496.3
        %v623 = vadd.f32 %v619, 1379496.3
        %v624 = vadd.f32 %v620, 1379496.3
        %v625 = vadd.f32 %v621, 1379496.3
        %v626 = vmul.f32 %v622, %v586
        %v627 = vmul.f32 %v623, %v587
        %v628 = vmul.f32 %v624, %v588
        %v629 = vmul.f32 %v625, %v589
        %v630 = vadd.f32 %v626, 5210869.0
        %v631 = vadd.f32 %v627, 5210869.0
        %v632 = vadd.f32 %v628, 5210869.0
        %v633 = vadd.f32 %v629, 5210869.0
        %v634 = vmul.f32 %v630, %v586
        %v635 = vmul.f32 %v631, %v587
        %v636 = vmul.f32 %v632, %v588
        %v637 = vmul.f32 %v633, %v589
        %v638 = vadd.f32 %v634, 11246929.0
        %v639 = vadd.f32 %v635, 11246929.0
        %v640 = vadd.f32 %v636, 11246929.0
        %v641 = vadd.f32 %v637, 11246929.0
        %v642 = vmul.f32 %v638, %v586
        %v643 = vmul.f32 %v639, %v587
        %v644 = vmul.f32 %v640, %v588
        %v645 = vmul.f32 %v641, %v589
        %v646 = vadd.f32 %v642, 10619610.0
        %v647 = vadd.f32 %v643, 10619610.0
        %v648 = vadd.f32 %v644, 10619610.0
        %v649 = vadd.f32 %v645, 10619610.0
        %v650 = vadd.f32 %v586, 36.0
        %v651 = vadd.f32 %v587, 36.0
        %v652 = vadd.f32 %v588, 36.0
        %v653 = vadd.f32 %v589, 36.0
        %v654 = vmul.f32 %v650, %v586
        %v655 = vmul.f32 %v651, %v587
        %v656 = vmul.f32 %v652, %v588
        %v657 = vmul.f32 %v653, %v589
        %v658 = vadd.f32 %v654, 546.0
        %v659 = vadd.f32 %v655, 546.0
        %v660 = vadd.f32 %v656, 546.0
        %v661 = vadd.f32 %v657, 546.0
        %v662 = vmul.f32 %v658, %v586
        %v663 = vmul.f32 %v659, %v587
        %v664 = vmul.f32 %v660, %v588
        %v665 = vmul.f32 %v661, %v589
        %v666 = vadd.f32 %v662, 4536.0
        %v667 = vadd.f32 %v663, 4536.0
        %v668 = vadd.f32 %v664, 4536.0
        %v669 = vadd.f32 %v665, 4536.0
        %v670 = vmul.f32 %v666, %v586
        %v671 = vmul.f32 %v667, %v587
        %v672 = vmul.f32 %v668, %v588
        %v673 = vmul.f32 %v669, %v589
        %v674 = vadd.f32 %v670, 22449.0
        %v675 = vadd.f32 %v671, 22449.0
        %v676 = vadd.f32 %v672, 22449.0
        %v677 = vadd.f32 %v673, 22449.0
        %v678 = vmul.f32 %v674, %v586
        %v679 = vmul.f32 %v675, %v587
        %v680 = vmul.f32 %v676, %v588
        %v681 = vmul.f32 %v677, %v589
        %v682 = vadd.f32 %v678, 67284.0
        %v683 = vadd.f32 %v679, 67284.0
        %v684 = vadd.f32 %v680, 67284.0
        %v685 = vadd.f32 %v681, 67284.0
        %v686 = vmul.f32 %v682, %v586
        %v687 = vmul.f32 %v683, %v587
        %v688 = vmul.f32 %v684, %v588
        %v689 = vmul.f32 %v685, %v589
        %v690 = vadd.f32 %v686, 118124.0
        %v691 = vadd.f32 %v687, 118124.0
        %v692 = vadd.f32 %v688, 118124.0
        %v693 = vadd.f32 %v689, 118124.0
        %v694 = vmul.f32 %v690, %v586
        %v695 = vmul.f32 %v691, %v587
        %v696 = vmul.f32 %v692, %v588
        %v697 = vmul.f32 %v693, %v589
        %v698 = vadd.f32 %v694, 109584.0
        %v699 = vadd.f32 %v695, 109584.0
        %v700 = vadd.f32 %v696, 109584.0
        %v701 = vadd.f32 %v697, 109584.0
        %v702 = vmul.f32 %v698, %v586
        %v703 = vmul.f32 %v699, %v587
        %v704 = vmul.f32 %v700, %v588
        %v705 = vmul.f32 %v701, %v589
        %v706 = vadd.f32 %v702, 40320.0
        %v707 = vadd.f32 %v703, 40320.0
        %v708 = vadd.f32 %v704, 40320.0
        %v709 = vadd.f32 %v705, 40320.0
        %v710 = vrcp.pop %v706
        %v711 = vmul.f32 %v706, %v710
        %v712 = vsub.f32 1.0, %v711
        %v713 = vmul.f32 %v710, %v712
        %v714 = vadd.f32 %v710, %v713
        %vm715 = vweird.f32 %v706
        %vm716 = vweird.f32 %v710
        %vm717 = vmor %vm715, %vm716
        %v718 = vsel %vm717, %v710, %v714
        %v719 = vand.u32 2147483647, %v706
        %vm720 = vcmp.eq.f32.partialorder %v719, 8.507059e+37
        %v721 = vand.u32 %v706, 2147483648
        %v722 = vor.u32 1.1754944e-38, %v721
        %v723 = vsel %vm720, %v722, %v718
        %v724 = vmul.f32 %v646, %v723
        %v725 = vrcp.pop %v707
        %v726 = vmul.f32 %v707, %v725
        %v727 = vsub.f32 1.0, %v726
        %v728 = vmul.f32 %v725, %v727
        %v729 = vadd.f32 %v725, %v728
        %vm730 = vweird.f32 %v707
        %vm731 = vweird.f32 %v725
        %vm732 = vmor %vm730, %vm731
        %v733 = vsel %vm732, %v725, %v729
        %v734 = vand.u32 2147483647, %v707
        %vm735 = vcmp.eq.f32.partialorder %v734, 8.507059e+37
        %v736 = vand.u32 %v707, 2147483648
        %v737 = vor.u32 1.1754944e-38, %v736
        %v738 = vsel %vm735, %v737, %v733
        %v739 = vmul.f32 %v647, %v738
        %v740 = vrcp.pop %v708
        %v741 = vmul.f32 %v708, %v740
        %v742 = vsub.f32 1.0, %v741
        %v743 = vmul.f32 %v740, %v742
        %v744 = vadd.f32 %v740, %v743
        %vm745 = vweird.f32 %v708
        %vm746 = vweird.f32 %v740
        %vm747 = vmor %vm745, %vm746
        %v748 = vsel %vm747, %v740, %v744
        %v749 = vand.u32 2147483647, %v708
        %vm750 = vcmp.eq.f32.partialorder %v749, 8.507059e+37
        %v751 = vand.u32 %v708, 2147483648
        %v752 = vor.u32 1.1754944e-38, %v751
        %v753 = vsel %vm750, %v752, %v748
        %v754 = vmul.f32 %v648, %v753
        %v755 = vrcp.pop %v709
        %v756 = vmul.f32 %v709, %v755
        %v757 = vsub.f32 1.0, %v756
        %v758 = vmul.f32 %v755, %v757
        %v759 = vadd.f32 %v755, %v758
        %vm760 = vweird.f32 %v709
        %vm761 = vweird.f32 %v755
        %vm762 = vmor %vm760, %vm761
        %v763 = vsel %vm762, %v755, %v759
        %v764 = vand.u32 2147483647, %v709
        %vm765 = vcmp.eq.f32.partialorder %v764, 8.507059e+37
        %v766 = vand.u32 %v709, 2147483648
        %v767 = vor.u32 1.1754944e-38, %v766
        %v768 = vsel %vm765, %v767, %v763
        %v769 = vmul.f32 %v649, %v768
        %v770 = vsub.f32 %v326, 1.0
        %v771 = vsub.f32 %v327, 1.0
        %v772 = vsub.f32 %v328, 1.0
        %v773 = vsub.f32 %v329, 1.0
        %v774 = vadd.f32 %v770, 7.5
        %v775 = vadd.f32 %v771, 7.5
        %v776 = vadd.f32 %v772, 7.5
        %v777 = vadd.f32 %v773, 7.5
        %v778 = vadd.f32 %v770, 0.5
        %v779 = vadd.f32 %v771, 0.5
        %v780 = vadd.f32 %v772, 0.5
        %v781 = vadd.f32 %v773, 0.5
        %v782 = vlog2.pop %v774
        %v783 = vmul.f32 %v782, 0.6931472
        %v784 = vlog2.pop %v775
        %v785 = vmul.f32 %v784, 0.6931472
        %v786 = vlog2.pop %v776
        %v787 = vmul.f32 %v786, 0.6931472
        %v788 = vlog2.pop %v777
        %v789 = vmul.f32 %v788, 0.6931472
        %v790 = vmul.f32 %v778, %v783
        %v791 = vmul.f32 %v779, %v785
        %v792 = vmul.f32 %v780, %v787
        %v793 = vmul.f32 %v781, %v789
        %v794 = vadd.f32 %v790, 0.9189385
        %v795 = vadd.f32 %v791, 0.9189385
        %v796 = vadd.f32 %v792, 0.9189385
        %v797 = vadd.f32 %v793, 0.9189385
        %v798 = vsub.f32 %v794, %v774
        %v799 = vsub.f32 %v795, %v775
        %v800 = vsub.f32 %v796, %v776
        %v801 = vsub.f32 %v797, %v777
        %v802 = vmin.f32 %v770, 16384.0
        %v803 = vmin.f32 %v771, 16384.0
        %v804 = vmin.f32 %v772, 16384.0
        %v805 = vmin.f32 %v773, 16384.0
        %v806 = vadd.f32 %v802, 60.458332
        %v807 = vadd.f32 %v803, 60.458332
        %v808 = vadd.f32 %v804, 60.458332
        %v809 = vadd.f32 %v805, 60.458332
        %v810 = vmul.f32 %v806, %v802
        %v811 = vmul.f32 %v807, %v803
        %v812 = vmul.f32 %v808, %v804
        %v813 = vmul.f32 %v809, %v805
        %v814 = vadd.f32 %v810, 1599.0425
        %v815 = vadd.f32 %v811, 1599.0425
        %v816 = vadd.f32 %v812, 1599.0425
        %v817 = vadd.f32 %v813, 1599.0425
        %v818 = vmul.f32 %v814, %v802
        %v819 = vmul.f32 %v815, %v803
        %v820 = vmul.f32 %v816, %v804
        %v821 = vmul.f32 %v817, %v805
        %v822 = vadd.f32 %v818, 24165.51
        %v823 = vadd.f32 %v819, 24165.51
        %v824 = vadd.f32 %v820, 24165.51
        %v825 = vadd.f32 %v821, 24165.51
        %v826 = vmul.f32 %v822, %v802
        %v827 = vmul.f32 %v823, %v803
        %v828 = vmul.f32 %v824, %v804
        %v829 = vmul.f32 %v825, %v805
        %v830 = vadd.f32 %v826, 228235.22
        %v831 = vadd.f32 %v827, 228235.22
        %v832 = vadd.f32 %v828, 228235.22
        %v833 = vadd.f32 %v829, 228235.22
        %v834 = vmul.f32 %v830, %v802
        %v835 = vmul.f32 %v831, %v803
        %v836 = vmul.f32 %v832, %v804
        %v837 = vmul.f32 %v833, %v805
        %v838 = vadd.f32 %v834, 1379496.3
        %v839 = vadd.f32 %v835, 1379496.3
        %v840 = vadd.f32 %v836, 1379496.3
        %v841 = vadd.f32 %v837, 1379496.3
        %v842 = vmul.f32 %v838, %v802
        %v843 = vmul.f32 %v839, %v803
        %v844 = vmul.f32 %v840, %v804
        %v845 = vmul.f32 %v841, %v805
        %v846 = vadd.f32 %v842, 5210869.0
        %v847 = vadd.f32 %v843, 5210869.0
        %v848 = vadd.f32 %v844, 5210869.0
        %v849 = vadd.f32 %v845, 5210869.0
        %v850 = vmul.f32 %v846, %v802
        %v851 = vmul.f32 %v847, %v803
        %v852 = vmul.f32 %v848, %v804
        %v853 = vmul.f32 %v849, %v805
        %v854 = vadd.f32 %v850, 11246929.0
        %v855 = vadd.f32 %v851, 11246929.0
        %v856 = vadd.f32 %v852, 11246929.0
        %v857 = vadd.f32 %v853, 11246929.0
        %v858 = vmul.f32 %v854, %v802
        %v859 = vmul.f32 %v855, %v803
        %v860 = vmul.f32 %v856, %v804
        %v861 = vmul.f32 %v857, %v805
        %v862 = vadd.f32 %v858, 10619610.0
        %v863 = vadd.f32 %v859, 10619610.0
        %v864 = vadd.f32 %v860, 10619610.0
        %v865 = vadd.f32 %v861, 10619610.0
        %v866 = vadd.f32 %v802, 36.0
        %v867 = vadd.f32 %v803, 36.0
        %v868 = vadd.f32 %v804, 36.0
        %v869 = vadd.f32 %v805, 36.0
        %v870 = vmul.f32 %v866, %v802
        %v871 = vmul.f32 %v867, %v803
        %v872 = vmul.f32 %v868, %v804
        %v873 = vmul.f32 %v869, %v805
        %v874 = vadd.f32 %v870, 546.0
        %v875 = vadd.f32 %v871, 546.0
        %v876 = vadd.f32 %v872, 546.0
        %v877 = vadd.f32 %v873, 546.0
        %v878 = vmul.f32 %v874, %v802
        %v879 = vmul.f32 %v875, %v803
        %v880 = vmul.f32 %v876, %v804
        %v881 = vmul.f32 %v877, %v805
        %v882 = vadd.f32 %v878, 4536.0
        %v883 = vadd.f32 %v879, 4536.0
        %v884 = vadd.f32 %v880, 4536.0
        %v885 = vadd.f32 %v881, 4536.0
        %v886 = vmul.f32 %v882, %v802
        %v887 = vmul.f32 %v883, %v803
        %v888 = vmul.f32 %v884, %v804
        %v889 = vmul.f32 %v885, %v805
        %v890 = vadd.f32 %v886, 22449.0
        %v891 = vadd.f32 %v887, 22449.0
        %v892 = vadd.f32 %v888, 22449.0
        %v893 = vadd.f32 %v889, 22449.0
        %v894 = vmul.f32 %v890, %v802
        %v895 = vmul.f32 %v891, %v803
        %v896 = vmul.f32 %v892, %v804
        %v897 = vmul.f32 %v893, %v805
        %v898 = vadd.f32 %v894, 67284.0
        %v899 = vadd.f32 %v895, 67284.0
        %v900 = vadd.f32 %v896, 67284.0
        %v901 = vadd.f32 %v897, 67284.0
        %v902 = vmul.f32 %v898, %v802
        %v903 = vmul.f32 %v899, %v803
        %v904 = vmul.f32 %v900, %v804
        %v905 = vmul.f32 %v901, %v805
        %v906 = vadd.f32 %v902, 118124.0
        %v907 = vadd.f32 %v903, 118124.0
        %v908 = vadd.f32 %v904, 118124.0
        %v909 = vadd.f32 %v905, 118124.0
        %v910 = vmul.f32 %v906, %v802
        %v911 = vmul.f32 %v907, %v803
        %v912 = vmul.f32 %v908, %v804
        %v913 = vmul.f32 %v909, %v805
        %v914 = vadd.f32 %v910, 109584.0
        %v915 = vadd.f32 %v911, 109584.0
        %v916 = vadd.f32 %v912, 109584.0
        %v917 = vadd.f32 %v913, 109584.0
        %v918 = vmul.f32 %v914, %v802
        %v919 = vmul.f32 %v915, %v803
        %v920 = vmul.f32 %v916, %v804
        %v921 = vmul.f32 %v917, %v805
        %v922 = vadd.f32 %v918, 40320.0
        %v923 = vadd.f32 %v919, 40320.0
        %v924 = vadd.f32 %v920, 40320.0
        %v925 = vadd.f32 %v921, 40320.0
        %v926 = vrcp.pop %v922
        %v927 = vmul.f32 %v922, %v926
        %v928 = vsub.f32 1.0, %v927
        %v929 = vmul.f32 %v926, %v928
        %v930 = vadd.f32 %v926, %v929
        %vm931 = vweird.f32 %v922
        %vm932 = vweird.f32 %v926
        %vm933 = vmor %vm931, %vm932
        %v934 = vsel %vm933, %v926, %v930
        %v935 = vand.u32 2147483647, %v922
        %vm936 = vcmp.eq.f32.partialorder %v935, 8.507059e+37
        %v937 = vand.u32 %v922, 2147483648
        %v938 = vor.u32 1.1754944e-38, %v937
        %v939 = vsel %vm936, %v938, %v934
        %v940 = vmul.f32 %v862, %v939
        %v941 = vrcp.pop %v923
        %v942 = vmul.f32 %v923, %v941
        %v943 = vsub.f32 1.0, %v942
        %v944 = vmul.f32 %v941, %v943
        %v945 = vadd.f32 %v941, %v944
        %vm946 = vweird.f32 %v923
        %vm947 = vweird.f32 %v941
        %vm948 = vmor %vm946, %vm947
        %v949 = vsel %vm948, %v941, %v945
        %v950 = vand.u32 2147483647, %v923
        %vm951 = vcmp.eq.f32.partialorder %v950, 8.507059e+37
        %v952 = vand.u32 %v923, 2147483648
        %v953 = vor.u32 1.1754944e-38, %v952
        %v954 = vsel %vm951, %v953, %v949
        %v955 = vmul.f32 %v863, %v954
        %v956 = vrcp.pop %v924
        %v957 = vmul.f32 %v924, %v956
        %v958 = vsub.f32 1.0, %v957
        %v959 = vmul.f32 %v956, %v958
        %v960 = vadd.f32 %v956, %v959
        %vm961 = vweird.f32 %v924
        %vm962 = vweird.f32 %v956
        %vm963 = vmor %vm961, %vm962
        %v964 = vsel %vm963, %v956, %v960
        %v965 = vand.u32 2147483647, %v924
        %vm966 = vcmp.eq.f32.partialorder %v965, 8.507059e+37
        %v967 = vand.u32 %v924, 2147483648
        %v968 = vor.u32 1.1754944e-38, %v967
        %v969 = vsel %vm966, %v968, %v964
        %v970 = vmul.f32 %v864, %v969
        %v971 = vrcp.pop %v925
        %v972 = vmul.f32 %v925, %v971
        %v973 = vsub.f32 1.0, %v972
        %v974 = vmul.f32 %v971, %v973
        %v975 = vadd.f32 %v971, %v974
        %vm976 = vweird.f32 %v925
        %vm977 = vweird.f32 %v971
        %vm978 = vmor %vm976, %vm977
        %v979 = vsel %vm978, %v971, %v975
        %v980 = vand.u32 2147483647, %v925
        %vm981 = vcmp.eq.f32.partialorder %v980, 8.507059e+37
        %v982 = vand.u32 %v925, 2147483648
        %v983 = vor.u32 1.1754944e-38, %v982
        %v984 = vsel %vm981, %v983, %v979
        %v985 = vmul.f32 %v865, %v984
        %v986 = vadd.f32 %v582, %v798
        %v987 = vadd.f32 %v583, %v799
        %v988 = vadd.f32 %v584, %v800
        %v989 = vadd.f32 %v585, %v801
        %v990 = vsub.f32 %v986, %v362
        %v991 = vsub.f32 %v987, %v363
        %v992 = vsub.f32 %v988, %v364
        %v993 = vsub.f32 %v989, %v365
        %v994 = vmul.f32 %v724, %v940
        %v995 = vmul.f32 %v739, %v955
        %v996 = vmul.f32 %v754, %v970
        %v997 = vmul.f32 %v769, %v985
        %v998 = vrcp.pop %v504
        %v999 = vmul.f32 %v504, %v998
        %v1000 = vsub.f32 1.0, %v999
        %v1001 = vmul.f32 %v998, %v1000
        %v1002 = vadd.f32 %v998, %v1001
        %vm1003 = vweird.f32 %v504
        %vm1004 = vweird.f32 %v998
        %vm1005 = vmor %vm1003, %vm1004
        %v1006 = vsel %vm1005, %v998, %v1002
        %v1007 = vand.u32 2147483647, %v504
        %vm1008 = vcmp.eq.f32.partialorder %v1007, 8.507059e+37
        %v1009 = vand.u32 %v504, 2147483648
        %v1010 = vor.u32 1.1754944e-38, %v1009
        %v1011 = vsel %vm1008, %v1010, %v1006
        %v1012 = vmul.f32 %v994, %v1011
        %v1013 = vrcp.pop %v519
        %v1014 = vmul.f32 %v519, %v1013
        %v1015 = vsub.f32 1.0, %v1014
        %v1016 = vmul.f32 %v1013, %v1015
        %v1017 = vadd.f32 %v1013, %v1016
        %vm1018 = vweird.f32 %v519
        %vm1019 = vweird.f32 %v1013
        %vm1020 = vmor %vm1018, %vm1019
        %v1021 = vsel %vm1020, %v1013, %v1017
        %v1022 = vand.u32 2147483647, %v519
        %vm1023 = vcmp.eq.f32.partialorder %v1022, 8.507059e+37
        %v1024 = vand.u32 %v519, 2147483648
        %v1025 = vor.u32 1.1754944e-38, %v1024
        %v1026 = vsel %vm1023, %v1025, %v1021
        %v1027 = vmul.f32 %v995, %v1026
        %v1028 = vrcp.pop %v534
        %v1029 = vmul.f32 %v534, %v1028
        %v1030 = vsub.f32 1.0, %v1029
        %v1031 = vmul.f32 %v1028, %v1030
        %v1032 = vadd.f32 %v1028, %v1031
        %vm1033 = vweird.f32 %v534
        %vm1034 = vweird.f32 %v1028
        %vm1035 = vmor %vm1033, %vm1034
        %v1036 = vsel %vm1035, %v1028, %v1032
        %v1037 = vand.u32 2147483647, %v534
        %vm1038 = vcmp.eq.f32.partialorder %v1037, 8.507059e+37
        %v1039 = vand.u32 %v534, 2147483648
        %v1040 = vor.u32 1.1754944e-38, %v1039
        %v1041 = vsel %vm1038, %v1040, %v1036
        %v1042 = vmul.f32 %v996, %v1041
        %v1043 = vrcp.pop %v549
        %v1044 = vmul.f32 %v549, %v1043
        %v1045 = vsub.f32 1.0, %v1044
        %v1046 = vmul.f32 %v1043, %v1045
        %v1047 = vadd.f32 %v1043, %v1046
        %vm1048 = vweird.f32 %v549
        %vm1049 = vweird.f32 %v1043
        %vm1050 = vmor %vm1048, %vm1049
        %v1051 = vsel %vm1050, %v1043, %v1047
        %v1052 = vand.u32 2147483647, %v549
        %vm1053 = vcmp.eq.f32.partialorder %v1052, 8.507059e+37
        %v1054 = vand.u32 %v549, 2147483648
        %v1055 = vor.u32 1.1754944e-38, %v1054
        %v1056 = vsel %vm1053, %v1055, %v1051
        %v1057 = vmul.f32 %v997, %v1056
        %v1058 = vlog2.pop %v1012
        %v1059 = vmul.f32 %v1058, 0.6931472
        %v1060 = vlog2.pop %v1027
        %v1061 = vmul.f32 %v1060, 0.6931472
        %v1062 = vlog2.pop %v1042
        %v1063 = vmul.f32 %v1062, 0.6931472
        %v1064 = vlog2.pop %v1057
        %v1065 = vmul.f32 %v1064, 0.6931472
        %v1066 = vadd.f32 %v990, %v1059
        %v1067 = vadd.f32 %v991, %v1061
        %v1068 = vadd.f32 %v992, %v1063
        %v1069 = vadd.f32 %v993, %v1065
        %v1070 = vadd.f32 %v318, %v322
        %v1071 = vadd.f32 %v319, %v323
        %v1072 = vadd.f32 %v320, %v324
        %v1073 = vadd.f32 %v321, %v325
        %v1074 = vrcp.pop %v326
        %v1075 = vmul.f32 %v326, %v1074
        %v1076 = vsub.f32 1.0, %v1075
        %v1077 = vmul.f32 %v1074, %v1076
        %v1078 = vadd.f32 %v1074, %v1077
        %vm1079 = vweird.f32 %v326
        %vm1080 = vweird.f32 %v1074
        %vm1081 = vmor %vm1079, %vm1080
        %v1082 = vsel %vm1081, %v1074, %v1078
        %v1083 = vand.u32 2147483647, %v326
        %vm1084 = vcmp.eq.f32.partialorder %v1083, 8.507059e+37
        %v1085 = vand.u32 %v326, 2147483648
        %v1086 = vor.u32 1.1754944e-38, %v1085
        %v1087 = vsel %vm1084, %v1086, %v1082
        %v1088 = vmul.f32 %v310, %v1087
        %v1089 = vrcp.pop %v327
        %v1090 = vmul.f32 %v327, %v1089
        %v1091 = vsub.f32 1.0, %v1090
        %v1092 = vmul.f32 %v1089, %v1091
        %v1093 = vadd.f32 %v1089, %v1092
        %vm1094 = vweird.f32 %v327
        %vm1095 = vweird.f32 %v1089
        %vm1096 = vmor %vm1094, %vm1095
        %v1097 = vsel %vm1096, %v1089, %v1093
        %v1098 = vand.u32 2147483647, %v327
        %vm1099 = vcmp.eq.f32.partialorder %v1098, 8.507059e+37
        %v1100 = vand.u32 %v327, 2147483648
        %v1101 = vor.u32 1.1754944e-38, %v1100
        %v1102 = vsel %vm1099, %v1101, %v1097
        %v1103 = vmul.f32 %v311, %v1102
        %v1104 = vrcp.pop %v328
        %v1105 = vmul.f32 %v328, %v1104
        %v1106 = vsub.f32 1.0, %v1105
        %v1107 = vmul.f32 %v1104, %v1106
        %v1108 = vadd.f32 %v1104, %v1107
        %vm1109 = vweird.f32 %v328
        %vm1110 = vweird.f32 %v1104
        %vm1111 = vmor %vm1109, %vm1110
        %v1112 = vsel %vm1111, %v1104, %v1108
        %v1113 = vand.u32 2147483647, %v328
        %vm1114 = vcmp.eq.f32.partialorder %v1113, 8.507059e+37
        %v1115 = vand.u32 %v328, 2147483648
        %v1116 = vor.u32 1.1754944e-38, %v1115
        %v1117 = vsel %vm1114, %v1116, %v1112
        %v1118 = vmul.f32 %v312, %v1117
        %v1119 = vrcp.pop %v329
        %v1120 = vmul.f32 %v329, %v1119
        %v1121 = vsub.f32 1.0, %v1120
        %v1122 = vmul.f32 %v1119, %v1121
        %v1123 = vadd.f32 %v1119, %v1122
        %vm1124 = vweird.f32 %v329
        %vm1125 = vweird.f32 %v1119
        %vm1126 = vmor %vm1124, %vm1125
        %v1127 = vsel %vm1126, %v1119, %v1123
        %v1128 = vand.u32 2147483647, %v329
        %vm1129 = vcmp.eq.f32.partialorder %v1128, 8.507059e+37
        %v1130 = vand.u32 %v329, 2147483648
        %v1131 = vor.u32 1.1754944e-38, %v1130
        %v1132 = vsel %vm1129, %v1131, %v1127
        %v1133 = vmul.f32 %v313, %v1132
        %v1134 = vadd.f32 %v1088, 1.0
        %v1135 = vlog2.pop %v1134
        %v1136 = vmul.f32 %v1135, 0.6931472
        %v1137 = vmul.f32 -0.5, %v1088
        %v1138 = vadd.f32 %v1137, 1.0
        %v1139 = vmul.f32 %v1138, %v1088
        %v1140 = vand.u32 2147483647, %v1088
        %vm1141 = vcmp.lt.f32.partialorder %v1140, 0.0004427343
        %v1142 = vsel %vm1141, %v1139, %v1136
        %v1143 = vadd.f32 %v1103, 1.0
        %v1144 = vlog2.pop %v1143
        %v1145 = vmul.f32 %v1144, 0.6931472
        %v1146 = vmul.f32 -0.5, %v1103
        %v1147 = vadd.f32 %v1146, 1.0
        %v1148 = vmul.f32 %v1147, %v1103
        %v1149 = vand.u32 2147483647, %v1103
        %vm1150 = vcmp.lt.f32.partialorder %v1149, 0.0004427343
        %v1151 = vsel %vm1150, %v1148, %v1145
        %v1152 = vadd.f32 %v1118, 1.0
        %v1153 = vlog2.pop %v1152
        %v1154 = vmul.f32 %v1153, 0.6931472
        %v1155 = vmul.f32 -0.5, %v1118
        %v1156 = vadd.f32 %v1155, 1.0
        %v1157 = vmul.f32 %v1156, %v1118
        %v1158 = vand.u32 2147483647, %v1118
        %vm1159 = vcmp.lt.f32.partialorder %v1158, 0.0004427343
        %v1160 = vsel %vm1159, %v1157, %v1154
        %v1161 = vadd.f32 %v1133, 1.0
        %v1162 = vlog2.pop %v1161
        %v1163 = vmul.f32 %v1162, 0.6931472
        %v1164 = vmul.f32 -0.5, %v1133
        %v1165 = vadd.f32 %v1164, 1.0
        %v1166 = vmul.f32 %v1165, %v1133
        %v1167 = vand.u32 2147483647, %v1133
        %vm1168 = vcmp.lt.f32.partialorder %v1167, 0.0004427343
        %v1169 = vsel %vm1168, %v1166, %v1163
        %v1170 = vmul.f32 %v1070, %v1142
        %v1171 = vmul.f32 %v1071, %v1151
        %v1172 = vmul.f32 %v1072, %v1160
        %v1173 = vmul.f32 %v1073, %v1169
        %v1174 = vadd.f32 %v310, 1e-10
        %v1175 = vadd.f32 %v311, 1e-10
        %v1176 = vadd.f32 %v312, 1e-10
        %v1177 = vadd.f32 %v313, 1e-10
        %v1178 = vrcp.pop %v1174
        %v1179 = vmul.f32 %v1174, %v1178
        %v1180 = vsub.f32 1.0, %v1179
        %v1181 = vmul.f32 %v1178, %v1180
        %v1182 = vadd.f32 %v1178, %v1181
        %vm1183 = vweird.f32 %v1174
        %vm1184 = vweird.f32 %v1178
        %vm1185 = vmor %vm1183, %vm1184
        %v1186 = vsel %vm1185, %v1178, %v1182
        %v1187 = vand.u32 2147483647, %v1174
        %vm1188 = vcmp.eq.f32.partialorder %v1187, 8.507059e+37
        %v1189 = vand.u32 %v1174, 2147483648
        %v1190 = vor.u32 1.1754944e-38, %v1189
        %v1191 = vsel %vm1188, %v1190, %v1186
        %v1192 = vmul.f32 %v326, %v1191
        %v1193 = vrcp.pop %v1175
        %v1194 = vmul.f32 %v1175, %v1193
        %v1195 = vsub.f32 1.0, %v1194
        %v1196 = vmul.f32 %v1193, %v1195
        %v1197 = vadd.f32 %v1193, %v1196
        %vm1198 = vweird.f32 %v1175
        %vm1199 = vweird.f32 %v1193
        %vm1200 = vmor %vm1198, %vm1199
        %v1201 = vsel %vm1200, %v1193, %v1197
        %v1202 = vand.u32 2147483647, %v1175
        %vm1203 = vcmp.eq.f32.partialorder %v1202, 8.507059e+37
        %v1204 = vand.u32 %v1175, 2147483648
        %v1205 = vor.u32 1.1754944e-38, %v1204
        %v1206 = vsel %vm1203, %v1205, %v1201
        %v1207 = vmul.f32 %v327, %v1206
        %v1208 = vrcp.pop %v1176
        %v1209 = vmul.f32 %v1176, %v1208
        %v1210 = vsub.f32 1.0, %v1209
        %v1211 = vmul.f32 %v1208, %v1210
        %v1212 = vadd.f32 %v1208, %v1211
        %vm1213 = vweird.f32 %v1176
        %vm1214 = vweird.f32 %v1208
        %vm1215 = vmor %vm1213, %vm1214
        %v1216 = vsel %vm1215, %v1208, %v1212
        %v1217 = vand.u32 2147483647, %v1176
        %vm1218 = vcmp.eq.f32.partialorder %v1217, 8.507059e+37
        %v1219 = vand.u32 %v1176, 2147483648
        %v1220 = vor.u32 1.1754944e-38, %v1219
        %v1221 = vsel %vm1218, %v1220, %v1216
        %v1222 = vmul.f32 %v328, %v1221
        %v1223 = vrcp.pop %v1177
        %v1224 = vmul.f32 %v1177, %v1223
        %v1225 = vsub.f32 1.0, %v1224
        %v1226 = vmul.f32 %v1223, %v1225
        %v1227 = vadd.f32 %v1223, %v1226
        %vm1228 = vweird.f32 %v1177
        %vm1229 = vweird.f32 %v1223
        %vm1230 = vmor %vm1228, %vm1229
        %v1231 = vsel %vm1230, %v1223, %v1227
        %v1232 = vand.u32 2147483647, %v1177
        %vm1233 = vcmp.eq.f32.partialorder %v1232, 8.507059e+37
        %v1234 = vand.u32 %v1177, 2147483648
        %v1235 = vor.u32 1.1754944e-38, %v1234
        %v1236 = vsel %vm1233, %v1235, %v1231
        %v1237 = vmul.f32 %v329, %v1236
        %v1238 = vlog2.pop %v1192
        %v1239 = vmul.f32 %v1238, 0.6931472
        %v1240 = vlog2.pop %v1207
        %v1241 = vmul.f32 %v1240, 0.6931472
        %v1242 = vlog2.pop %v1222
        %v1243 = vmul.f32 %v1242, 0.6931472
        %v1244 = vlog2.pop %v1237
        %v1245 = vmul.f32 %v1244, 0.6931472
        %v1246 = vmul.f32 %v322, %v1239
        %v1247 = vmul.f32 %v323, %v1241
        %v1248 = vmul.f32 %v324, %v1243
        %v1249 = vmul.f32 %v325, %v1245
        %v1250 = vadd.f32 %v1170, %v1246
        %v1251 = vadd.f32 %v1171, %v1247
        %v1252 = vadd.f32 %v1172, %v1248
        %v1253 = vadd.f32 %v1173, %v1249
        %v1254 = vadd.f32 %v1066, %v1250
        %v1255 = vadd.f32 %v1067, %v1251
        %v1256 = vadd.f32 %v1068, %v1252
        %v1257 = vadd.f32 %v1069, %v1253
        %v1258 = vld [vmem:[#allocation2] sm:$0xff]
        %v1259 = vadd.f32 %v1254, %v1255
        %v1260 = vadd.f32 %v1259, %v1256
        %v1261 = vadd.f32 %v1260, %v1257
        %1262 = vadd.xlane.f32.xlu0 %v1261
        %v1263 = vpop.xlane.xlu0 %1262
        %v1264 = vadd.f32 %v1258, %v1263
        %vm1265 = vcmask 7168
        %1266 = vst.msk [vmem:[#allocation2] sm:$0xff] %vm1265, %v1264
        %v1267 = vlaneseq
        %v1268 = vshrl.u32 %v1267, 7
        %vm1269 = vcmp.lt.s32.totalorder %v1268, 7
        %v1270 = vand.u32 2147483647, %v310
        %v1271 = vand.u32 2147483647, %v311
        %v1272 = vand.u32 2147483647, %v312
        %v1273 = vand.u32 2147483647, %v313
        %v1274 = vsel %vm1269, %v1270, 0.0
        %v1275 = vsel %vm1269, %v1271, 0.0
        %v1276 = vsel %vm1269, %v1272, 0.0
        %v1277 = vsel %vm1269, %v1273, 0.0
        %v1278 = vld [vmem:[#allocation3] sm:$0xff]
        %v1279 = vadd.f32 %v1274, %v1275
        %v1280 = vadd.f32 %v1279, %v1276
        %v1281 = vadd.f32 %v1280, %v1277
        %1282 = vadd.xlane.f32.xlu0 %v1281
        %v1283 = vpop.xlane.xlu0 %1282
        %v1284 = vadd.f32 %v1278, %v1283
        %1285 = vst.msk [vmem:[#allocation3] sm:$0xff] %vm1265, %v1284
        %p1286 = scmp.eq.s32.totalorder %s25, 1
        // Predicated region
        $region49: #{tpu_custom_call.1} parent=31 // pred_check
          %p1287 = pneg %p1286
        $region50: #{tpu_custom_call.1} parent=31 // pred_check_branch
          %1289 = sbr.rel (%p1287) target = $region52
        $region51: #{tpu_custom_call.1} parent=31 // pred_region
          %v1290 = vld [vmem:[#allocation2] sm:$0xff]
          %v1291 = vsel %vm1265, %v1290, 0.0
          %v1292 = vrot.slane %v1291, 4
          %v1293 = vadd.f32 %v1291, %v1292
          %v1294 = vrot.slane %v1293, 2
          %v1295 = vadd.f32 %v1293, %v1294
          %v1296 = vrot.slane %v1295, 1
          %v1297 = vadd.f32 %v1295, %v1296
          %v1298 = vmul.f32 %v1297, 6.1035156e-05
          %v1299 = vld [vmem:[#allocation3] sm:$0xff]
          %v1300 = vsel %vm1265, %v1299, 0.0
          %v1301 = vrot.slane %v1300, 4
          %v1302 = vadd.f32 %v1300, %v1301
          %v1303 = vrot.slane %v1302, 2
          %v1304 = vadd.f32 %v1302, %v1303
          %v1305 = vrot.slane %v1304, 1
          %v1306 = vadd.f32 %v1304, %v1305
          %v1307 = vmul.f32 %v1306, 0.01
          %v1308 = vadd.f32 %v1298, %v1307
          %vm1309 = vcmask 0
          %1310 = vst.msk [vmem:[%s302] sm:$0x1] %vm1309, %v1308
        $region52: #{tpu_custom_call.1} parent=31 // pred_fallthru
          _
        %p1311 = scmp.lt.s32.totalorder %s24, 1
        %s1312 = scalar_select %p1311, %s24, 1
        %s1313 = scalar_lea.vmem %s3, %s1312
        // Predicated region
        $region53: #{tpu_custom_call.1} parent=31 // pred_check
          %p1314 = pneg %p140
        $region54: #{tpu_custom_call.1} parent=31 // pred_check_branch
          %1316 = sbr.rel (%p1314) target = $region56
        $region55: #{tpu_custom_call.1} parent=31 // pred_region
          _
        $region56: #{tpu_custom_call.1} parent=31 // pred_fallthru
          _
      $region32: #{tpu_custom_call.1} parent=5 // pred_fallthru
        _
      %p1317 = scmp.le.s32.totalorder 2, %s15
      // Predicated region
      $region57: #{tpu_custom_call.1} parent=5 // pred_check
        %p1318 = pneg %p1317
      $region58: #{tpu_custom_call.1} parent=5 // pred_check_branch
        %1320 = sbr.rel (%p1318) target = $region60
      $region59: #{tpu_custom_call.1} parent=5 // pred_region
        %s1321 = ssub.s32 %s15, 2
        // Predicated region
        $region61: #{tpu_custom_call.1} parent=59 // pred_check
          %p1322 = pneg %p146
        $region62: #{tpu_custom_call.1} parent=59 // pred_check_branch
          %1324 = sbr.rel (%p1322) target = $region64
        $region63: #{tpu_custom_call.1} parent=59 // pred_region
          %p1325 = scmp.lt.s32.totalorder %s26, 1
          %s1326 = scalar_select %p1325, %s26, 1
          %s1327 = scalar_lea.vmem %s3, %s1326
        $region64: #{tpu_custom_call.1} parent=59 // pred_fallthru
          _
      $region60: #{tpu_custom_call.1} parent=5 // pred_fallthru
        _
    $region6: #{tpu_custom_call.1} parent=1 // loop_footer
      %s19 = sadd.s32 1, %s15
    $region7: #{tpu_custom_call.1} parent=1 // loop_footer_branch
      %14 = sbr.rel target = $region3
    $region8: #{tpu_custom_call.1} parent=1 // loop_exit
      _
    %1328 = vsyncpa [#allocation5], 1
    %s1329 = scalar_lea.sflag [#allocation5], 1
    %1330 = vsyncpa %s1329, 1
    %1331 = vsyncpa [#allocation7], 1
    %s1332 = scalar_lea.sflag [#allocation7], 1
    %1333 = vsyncpa %s1332, 1

</llo_original>
